<compile_context>
chip_gen: v6e
topology: v6e:2x2x1
jax: 0.10.0
libtpu: 0.0.40
codegen_flags: <defaults>
</compile_context>

<pallas_src>
import jax
import jax.numpy as jnp
from jax import lax
from jax.experimental import pallas as pl
from jax.experimental.pallas import tpu as pltpu


def edge_gated_gcn_kernel(
    nf_ref, ef_ref,              # [N,F] f32, [E,F] f32
    src_col_ref, dst_col_ref,    # [E,1] int32
    dst_row_ref,                 # [1,E] int32
    w_node_ref,                  # [F,4F] bf16: [src_gate | dst_update | dst_gate | src_update]
    w_eg_ref,                    # [F,F]  bf16: edge_gate
    vec_ref,                     # [8,F]  f32: [b_du, b_su, b_m, gn, bn, ge, be, pad]
    x_ref, y_ref,                # outputs [N,F], [E,F] f32
    payload_ref,                 # [E,2F] bf16 VMEM scratch
):
    f32, bf16 = jnp.float32, jnp.bfloat16
    N, F = nf_ref.shape
    E = ef_ref.shape[0]

    nf = nf_ref[...]
    ef = ef_ref[...]
    vecs = vec_ref[...]
    b_du, b_su, b_m = vecs[0:1], vecs[1:2], vecs[2:3]
    gn, bn, ge, be = vecs[3:4], vecs[4:5], vecs[5:6], vecs[6:7]

    # One-hot incidence built in-kernel from the indices (zero E*N HBM traffic).
    col_ids = lax.broadcasted_iota(jnp.int32, (E, N), 1)      # node id along lanes
    S = (src_col_ref[...] == col_ids).astype(bf16)            # [E,N] gather-by-source
    D = (dst_col_ref[...] == col_ids).astype(bf16)            # [E,N] gather-by-destination
    row_ids = lax.broadcasted_iota(jnp.int32, (N, E), 0)      # node id along sublanes
    Dt = (dst_row_ref[...] == row_ids).astype(bf16)           # [N,E] scatter matrix (D^T)

    # (1) All four node-side linears as ONE bf16 MXU pass: [N,F] @ [F,4F].
    fused = jnp.dot(nf.astype(bf16), w_node_ref[...], preferred_element_type=f32)  # [N,4F]
    e_dst = fused[:, 2 * F:3 * F]                 # dst_gate   (bias folded into b_m)
    su    = fused[:, 3 * F:4 * F] + b_su          # src_update

    # (2) Gather to edges: one S pass over [e_src | Bh] (== fused[:, :2F], no concat),
    #     one D pass for e_dst.
    gathered = jnp.dot(S, fused[:, :2 * F].astype(bf16), preferred_element_type=f32)  # [E,2F]
    e_src_e = gathered[:, :F]                     # src_gate bias folded into b_m
    Bh_e    = gathered[:, F:] + b_du              # dst_update bias applied post-gather
    e_dst_e = jnp.dot(D, e_dst.astype(bf16), preferred_element_type=f32)              # [E,F]

    # (3) Edge gating; the three gate biases were folded into the single b_m.
    m = (e_src_e + e_dst_e
         + jnp.dot(ef.astype(bf16), w_eg_ref[...], preferred_element_type=f32)
         + b_m)                                    # [E,F] f32
    sigma = jax.nn.sigmoid(m)

    # (4) Fused scatter D^T @ [sigma*Bh | sigma]; payload cast half-by-half into bf16 scratch.
    payload_ref[:, :F] = (sigma * Bh_e).astype(bf16)
    payload_ref[:, F:] = sigma.astype(bf16)
    agg = jnp.dot(Dt, payload_ref[...], preferred_element_type=f32)    # [N,2F]
    h = agg[:, :F] * pl.reciprocal(agg[:, F:] + 1e-6, approx=True)     # EUP divide

    x = su + h                                                         # [N,F]

    # (5) BatchNorm1d (training-mode batch stats, biased variance, no running-stat update)
    #     + SiLU, all f32 on the VPU/EUP.
    def bn_silu(z, gamma, beta):
        mu = jnp.mean(z, axis=0, keepdims=True)
        var = jnp.mean((z - mu) ** 2, axis=0, keepdims=True)
        zn = (z - mu) * lax.rsqrt(var + 1e-5) * gamma + beta
        return zn * jax.nn.sigmoid(zn)

    # (6) Residual (input_features == output_features). Lane-dense stores at F=128.
    x_ref[...] = nf + bn_silu(x, gn, bn)
    y_ref[...] = ef + bn_silu(m, ge, be)


def edge_gated_graph_conv(node_feats, edge_feats, src_idx, dst_idx, params):
    N, F = node_feats.shape
    E = edge_feats.shape[0]

    src_col = src_idx.astype(jnp.int32).reshape(E, 1)
    dst_col = dst_idx.astype(jnp.int32).reshape(E, 1)
    dst_row = dst_idx.astype(jnp.int32).reshape(1, E)

    # Packed node-side weight, reordered so the S-gather operand is fused[:, :2F]:
    # [src_gate | dst_update | dst_gate | src_update], stored bf16 for the MXU.
    w_node = jnp.concatenate(
        [params["w_src_gate"], params["w_dst_update"],
         params["w_dst_gate"], params["w_src_update"]], axis=1).astype(jnp.bfloat16)
    w_eg = params["w_edge_gate"].astype(jnp.bfloat16)

    # Gate biases commute through the one-hot gathers (rows sum to 1): fold into one.
    b_m = params["b_src_gate"] + params["b_dst_gate"] + params["b_edge_gate"]

    # Pack the seven [1,F] vectors into one [8,F] operand (one DMA, one f32 sublane tile).
    vecs = jnp.concatenate([
        params["b_dst_update"], params["b_src_update"], b_m,
        params["bn_nodes_gamma"], params["bn_nodes_beta"],
        params["bn_edges_gamma"], params["bn_edges_beta"],
        jnp.zeros((1, F), jnp.float32),
    ], axis=0)

    args = (node_feats, edge_feats, src_col, dst_col, dst_row, w_node, w_eg, vecs)

    vmem = pl.BlockSpec(memory_space=pltpu.MemorySpace.VMEM)
    return pl.pallas_call(
        edge_gated_gcn_kernel,
        out_shape=(
            jax.ShapeDtypeStruct((N, F), jnp.float32),
            jax.ShapeDtypeStruct((E, F), jnp.float32),
        ),
        in_specs=[vmem] * len(args),
        out_specs=(vmem, vmem),
        scratch_shapes=[pltpu.VMEM((E, 2 * F), jnp.bfloat16)],
    )(*args)


def reference_forward(node_feats, edge_feats, src_idx, dst_idx, params):
    """Pure-JAX (f32) reference mirroring the PyTorch/DGL forward."""
    def lin(x, w, b):
        return x @ w + b

    e_src = lin(node_feats, params["w_src_gate"], params["b_src_gate"])
    e_dst = lin(node_feats, params["w_dst_gate"], params["b_dst_gate"])
    m = e_src[src_idx] + e_dst[dst_idx] + lin(
        edge_feats, params["w_edge_gate"], params["b_edge_gate"])
    sigma = jax.nn.sigmoid(m)
    Bh = lin(node_feats, params["w_dst_update"], params["b_dst_update"])
    N = node_feats.shape[0]
    sum_sigma_h = jax.ops.segment_sum(sigma * Bh[src_idx], dst_idx, num_segments=N)
    sum_sigma = jax.ops.segment_sum(sigma, dst_idx, num_segments=N)
    h = sum_sigma_h / (sum_sigma + 1e-6)
    x = lin(node_feats, params["w_src_update"], params["b_src_update"]) + h

    def bn_silu(z, gamma, beta):
        mu = z.mean(0, keepdims=True)
        var = ((z - mu) ** 2).mean(0, keepdims=True)
        zn = (z - mu) * lax.rsqrt(var + 1e-5) * gamma + beta
        return zn * jax.nn.sigmoid(zn)

    x = bn_silu(x, params["bn_nodes_gamma"], params["bn_nodes_beta"])
    y = bn_silu(m, params["bn_edges_gamma"], params["bn_edges_beta"])
    return node_feats + x, edge_feats + y


def init_params(key, in_features, out_features):
    """PyTorch-style init: Linear U(-k, k), k = 1/sqrt(fan_in); BN gamma=1, beta=0."""
    k = 1.0 / jnp.sqrt(jnp.float32(in_features))
    names = ["src_gate", "dst_gate", "edge_gate", "src_update", "dst_update"]
    params = {}
    keys = jax.random.split(key, 2 * len(names))
    for i, name in enumerate(names):
        # weights stored pre-transposed as [F_in, F_out]
        params[f"w_{name}"] = jax.random.uniform(
            keys[2 * i], (in_features, out_features), jnp.float32, -k, k)
        params[f"b_{name}"] = jax.random.uniform(
            keys[2 * i + 1], (1, out_features), jnp.float32, -k, k)
    params["bn_nodes_gamma"] = jnp.ones((1, out_features), jnp.float32)
    params["bn_nodes_beta"] = jnp.zeros((1, out_features), jnp.float32)
    params["bn_edges_gamma"] = jnp.ones((1, out_features), jnp.float32)
    params["bn_edges_beta"] = jnp.zeros((1, out_features), jnp.float32)
    return params


if __name__ == "__main__":
    key = jax.random.PRNGKey(0)
    k_nf, k_ef, k_src, k_dst, k_par = jax.random.split(key, 5)

    # nodes, edges, features (in == out for residual); F=128 keeps stores lane-dense.
    N, E, F = 32, 96, 128

    node_feats = jax.random.normal(k_nf, (N, F), jnp.float32)
    edge_feats = jax.random.normal(k_ef, (E, F), jnp.float32)
    src_idx = jax.random.randint(k_src, (E,), 0, N)
    dst_idx = jax.random.randint(k_dst, (E,), 0, N)

    params = init_params(k_par, F, F)

    fwd = jax.jit(edge_gated_graph_conv)
    x, y = fwd(node_feats, edge_feats, src_idx, dst_idx, params)
    jax.block_until_ready((x, y))

    assert x.shape == (N, F) and y.shape == (E, F)
    assert jnp.all(jnp.isfinite(x)) and jnp.all(jnp.isfinite(y))

    # correctness vs pure-JAX f32 reference (bf16 MXU operands + approx reciprocal
    # introduce only small numerical differences)
    x_ref, y_ref = reference_forward(node_feats, edge_feats, src_idx, dst_idx, params)
    err = max(float(jnp.max(jnp.abs(x - x_ref))), float(jnp.max(jnp.abs(y - y_ref))))
    assert err < 0.1, f"max abs error vs reference too large: {err}"

    print("KERNEL_OK")
</pallas_src>

<mosaic_0001>
module attributes {stable_mosaic.version = 11 : i64} {
  func.func @edge_gated_gcn_kernel(%arg0: memref<32x128xf32, #tpu.memory_space<vmem>>, %arg1: memref<96x128xf32, #tpu.memory_space<vmem>>, %arg2: memref<96x1xi32, #tpu.memory_space<vmem>>, %arg3: memref<96x1xi32, #tpu.memory_space<vmem>>, %arg4: memref<1x96xi32, #tpu.memory_space<vmem>>, %arg5: memref<128x512xbf16, #tpu.memory_space<vmem>>, %arg6: memref<128x128xbf16, #tpu.memory_space<vmem>>, %arg7: memref<8x128xf32, #tpu.memory_space<vmem>>, %arg8: memref<32x128xf32, #tpu.memory_space<vmem>>, %arg9: memref<96x128xf32, #tpu.memory_space<vmem>>, %arg10: memref<96x256xbf16, #tpu.memory_space<vmem>>) attributes {dimension_semantics = [], scalar_prefetch = 0 : i64, scratch_operands = 1 : i64, tpu.core_type = #tpu.core_type<tc>} {
    %c0 = arith.constant 0 : index
    %c0_0 = arith.constant 0 : index
    %0 = vector.load %arg0[%c0, %c0_0] : memref<32x128xf32, #tpu.memory_space<vmem>>, vector<32x128xf32>
    %c0_1 = arith.constant 0 : index
    %c0_2 = arith.constant 0 : index
    %1 = vector.load %arg1[%c0_1, %c0_2] : memref<96x128xf32, #tpu.memory_space<vmem>>, vector<96x128xf32>
    %c0_3 = arith.constant 0 : index
    %c0_4 = arith.constant 0 : index
    %2 = vector.load %arg7[%c0_3, %c0_4] : memref<8x128xf32, #tpu.memory_space<vmem>>, vector<8x128xf32>
    %3 = vector.extract_strided_slice %2 {offsets = [0, 0], sizes = [1, 128], strides = [1, 1]} : vector<8x128xf32> to vector<1x128xf32>
    %4 = vector.extract_strided_slice %2 {offsets = [1, 0], sizes = [1, 128], strides = [1, 1]} : vector<8x128xf32> to vector<1x128xf32>
    %5 = vector.extract_strided_slice %2 {offsets = [2, 0], sizes = [1, 128], strides = [1, 1]} : vector<8x128xf32> to vector<1x128xf32>
    %6 = vector.extract_strided_slice %2 {offsets = [3, 0], sizes = [1, 128], strides = [1, 1]} : vector<8x128xf32> to vector<1x128xf32>
    %7 = vector.extract_strided_slice %2 {offsets = [4, 0], sizes = [1, 128], strides = [1, 1]} : vector<8x128xf32> to vector<1x128xf32>
    %8 = vector.extract_strided_slice %2 {offsets = [5, 0], sizes = [1, 128], strides = [1, 1]} : vector<8x128xf32> to vector<1x128xf32>
    %9 = vector.extract_strided_slice %2 {offsets = [6, 0], sizes = [1, 128], strides = [1, 1]} : vector<8x128xf32> to vector<1x128xf32>
    %10 = tpu.iota {dimensions = array<i32: 1>} : vector<96x32xi32>
    %c0_5 = arith.constant 0 : index
    %c0_6 = arith.constant 0 : index
    %11 = vector.load %arg2[%c0_5, %c0_6] : memref<96x1xi32, #tpu.memory_space<vmem>>, vector<96x1xi32>
    %12 = vector.broadcast %11 : vector<96x1xi32> to vector<96x32xi32>
    %13 = arith.cmpi eq, %12, %10 : vector<96x32xi32>
    %14 = arith.extui %13 : vector<96x32xi1> to vector<96x32xi32>
    %15 = arith.sitofp %14 : vector<96x32xi32> to vector<96x32xf32>
    %16 = arith.truncf %15 : vector<96x32xf32> to vector<96x32xbf16>
    %c0_7 = arith.constant 0 : index
    %c0_8 = arith.constant 0 : index
    %17 = vector.load %arg3[%c0_7, %c0_8] : memref<96x1xi32, #tpu.memory_space<vmem>>, vector<96x1xi32>
    %18 = vector.broadcast %17 : vector<96x1xi32> to vector<96x32xi32>
    %19 = arith.cmpi eq, %18, %10 : vector<96x32xi32>
    %20 = arith.extui %19 : vector<96x32xi1> to vector<96x32xi32>
    %21 = arith.sitofp %20 : vector<96x32xi32> to vector<96x32xf32>
    %22 = arith.truncf %21 : vector<96x32xf32> to vector<96x32xbf16>
    %23 = tpu.iota {dimensions = array<i32: 0>} : vector<32x96xi32>
    %c0_9 = arith.constant 0 : index
    %c0_10 = arith.constant 0 : index
    %24 = vector.load %arg4[%c0_9, %c0_10] : memref<1x96xi32, #tpu.memory_space<vmem>>, vector<1x96xi32>
    %25 = vector.broadcast %24 : vector<1x96xi32> to vector<32x96xi32>
    %26 = arith.cmpi eq, %25, %23 : vector<32x96xi32>
    %27 = arith.extui %26 : vector<32x96xi1> to vector<32x96xi32>
    %28 = arith.sitofp %27 : vector<32x96xi32> to vector<32x96xf32>
    %29 = arith.truncf %28 : vector<32x96xf32> to vector<32x96xbf16>
    %30 = arith.truncf %0 : vector<32x128xf32> to vector<32x128xbf16>
    %c0_11 = arith.constant 0 : index
    %c0_12 = arith.constant 0 : index
    %31 = vector.load %arg5[%c0_11, %c0_12] : memref<128x512xbf16, #tpu.memory_space<vmem>>, vector<128x512xbf16>
    %cst = arith.constant dense<0.000000e+00> : vector<32x512xf32>
    %32 = tpu.matmul %30, %31, %cst {dimension_numbers = #tpu.dot_dimension_numbers<[1], [0], [0], [1], [0, 0, 1, 1], [], []>} : vector<32x128xbf16>, vector<128x512xbf16>, vector<32x512xf32> -> vector<32x512xf32>
    %33 = vector.extract_strided_slice %32 {offsets = [0, 256], sizes = [32, 128], strides = [1, 1]} : vector<32x512xf32> to vector<32x128xf32>
    %34 = vector.extract_strided_slice %32 {offsets = [0, 384], sizes = [32, 128], strides = [1, 1]} : vector<32x512xf32> to vector<32x128xf32>
    %35 = vector.broadcast %4 : vector<1x128xf32> to vector<32x128xf32>
    %36 = arith.addf %34, %35 : vector<32x128xf32>
    %37 = vector.extract_strided_slice %32 {offsets = [0, 0], sizes = [32, 256], strides = [1, 1]} : vector<32x512xf32> to vector<32x256xf32>
    %38 = arith.truncf %37 : vector<32x256xf32> to vector<32x256xbf16>
    %cst_13 = arith.constant dense<0.000000e+00> : vector<96x256xf32>
    %39 = tpu.matmul %16, %38, %cst_13 {dimension_numbers = #tpu.dot_dimension_numbers<[1], [0], [0], [1], [0, 0, 1, 1], [], []>} : vector<96x32xbf16>, vector<32x256xbf16>, vector<96x256xf32> -> vector<96x256xf32>
    %40 = vector.extract_strided_slice %39 {offsets = [0, 0], sizes = [96, 128], strides = [1, 1]} : vector<96x256xf32> to vector<96x128xf32>
    %41 = vector.extract_strided_slice %39 {offsets = [0, 128], sizes = [96, 128], strides = [1, 1]} : vector<96x256xf32> to vector<96x128xf32>
    %42 = vector.broadcast %3 : vector<1x128xf32> to vector<96x128xf32>
    %43 = arith.addf %41, %42 : vector<96x128xf32>
    %44 = arith.truncf %33 : vector<32x128xf32> to vector<32x128xbf16>
    %cst_14 = arith.constant dense<0.000000e+00> : vector<96x128xf32>
    %45 = tpu.matmul %22, %44, %cst_14 {dimension_numbers = #tpu.dot_dimension_numbers<[1], [0], [0], [1], [0, 0, 1, 1], [], []>} : vector<96x32xbf16>, vector<32x128xbf16>, vector<96x128xf32> -> vector<96x128xf32>
    %46 = arith.addf %40, %45 : vector<96x128xf32>
    %47 = arith.truncf %1 : vector<96x128xf32> to vector<96x128xbf16>
    %c0_15 = arith.constant 0 : index
    %c0_16 = arith.constant 0 : index
    %48 = vector.load %arg6[%c0_15, %c0_16] : memref<128x128xbf16, #tpu.memory_space<vmem>>, vector<128x128xbf16>
    %cst_17 = arith.constant dense<0.000000e+00> : vector<96x128xf32>
    %49 = tpu.matmul %47, %48, %cst_17 {dimension_numbers = #tpu.dot_dimension_numbers<[1], [0], [0], [1], [0, 0, 1, 1], [], []>} : vector<96x128xbf16>, vector<128x128xbf16>, vector<96x128xf32> -> vector<96x128xf32>
    %50 = arith.addf %46, %49 : vector<96x128xf32>
    %51 = vector.broadcast %5 : vector<1x128xf32> to vector<96x128xf32>
    %52 = arith.addf %50, %51 : vector<96x128xf32>
    %53 = arith.negf %52 : vector<96x128xf32>
    %54 = math.exp %53 : vector<96x128xf32>
    %cst_18 = arith.constant 1.000000e+00 : f32
    %55 = vector.broadcast %cst_18 : f32 to vector<96x128xf32>
    %56 = arith.addf %55, %54 : vector<96x128xf32>
    %57 = arith.divf %55, %56 : vector<96x128xf32>
    %58 = arith.mulf %57, %43 : vector<96x128xf32>
    %59 = arith.truncf %58 : vector<96x128xf32> to vector<96x128xbf16>
    %c0_19 = arith.constant 0 : index
    %c0_20 = arith.constant 0 : index
    %60 = vector.load %arg10[%c0_19, %c0_20] : memref<96x256xbf16, #tpu.memory_space<vmem>>, vector<96x128xbf16>
    tpu.vector_store %arg10[%c0_19, %c0_20], %59 {strides = array<i32>} : memref<96x256xbf16, #tpu.memory_space<vmem>>, vector<96x128xbf16>,
    %61 = arith.truncf %57 : vector<96x128xf32> to vector<96x128xbf16>
    %c0_21 = arith.constant 0 : index
    %c128 = arith.constant 128 : index
    %62 = vector.load %arg10[%c0_21, %c128] : memref<96x256xbf16, #tpu.memory_space<vmem>>, vector<96x128xbf16>
    tpu.vector_store %arg10[%c0_21, %c128], %61 {strides = array<i32>} : memref<96x256xbf16, #tpu.memory_space<vmem>>, vector<96x128xbf16>,
    %c0_22 = arith.constant 0 : index
    %c0_23 = arith.constant 0 : index
    %63 = vector.load %arg10[%c0_22, %c0_23] : memref<96x256xbf16, #tpu.memory_space<vmem>>, vector<96x256xbf16>
    %cst_24 = arith.constant dense<0.000000e+00> : vector<32x256xf32>
    %64 = tpu.matmul %29, %63, %cst_24 {dimension_numbers = #tpu.dot_dimension_numbers<[1], [0], [0], [1], [0, 0, 1, 1], [], []>} : vector<32x96xbf16>, vector<96x256xbf16>, vector<32x256xf32> -> vector<32x256xf32>
    %65 = vector.extract_strided_slice %64 {offsets = [0, 0], sizes = [32, 128], strides = [1, 1]} : vector<32x256xf32> to vector<32x128xf32>
    %66 = vector.extract_strided_slice %64 {offsets = [0, 128], sizes = [32, 128], strides = [1, 1]} : vector<32x256xf32> to vector<32x128xf32>
    %cst_25 = arith.constant 9.99999997E-7 : f32
    %67 = vector.broadcast %cst_25 : f32 to vector<32x128xf32>
    %68 = arith.addf %66, %67 : vector<32x128xf32>
    %69 = tpu.reciprocal %68 {approx = true} : vector<32x128xf32> -> vector<32x128xf32>
    %70 = arith.mulf %65, %69 : vector<32x128xf32>
    %71 = arith.addf %36, %70 : vector<32x128xf32>
    %cst_26 = arith.constant dense<0.000000e+00> : vector<128xf32>
    %72 = vector.multi_reduction <add>, %71, %cst_26 [0] : vector<32x128xf32> to vector<128xf32>
    %73 = vector.shape_cast %72 : vector<128xf32> to vector<1x128xf32>
    %cst_27 = arith.constant 3.200000e+01 : f32
    %74 = vector.broadcast %cst_27 : f32 to vector<1x128xf32>
    %75 = arith.divf %73, %74 : vector<1x128xf32>
    %76 = vector.broadcast %75 : vector<1x128xf32> to vector<32x128xf32>
    %77 = arith.subf %71, %76 : vector<32x128xf32>
    %78 = arith.mulf %77, %77 : vector<32x128xf32>
    %cst_28 = arith.constant dense<0.000000e+00> : vector<128xf32>
    %79 = vector.multi_reduction <add>, %78, %cst_28 [0] : vector<32x128xf32> to vector<128xf32>
    %80 = vector.shape_cast %79 : vector<128xf32> to vector<1x128xf32>
    %cst_29 = arith.constant 3.200000e+01 : f32
    %81 = vector.broadcast %cst_29 : f32 to vector<1x128xf32>
    %82 = arith.divf %80, %81 : vector<1x128xf32>
    %83 = vector.broadcast %75 : vector<1x128xf32> to vector<32x128xf32>
    %84 = arith.subf %71, %83 : vector<32x128xf32>
    %cst_30 = arith.constant 9.99999974E-6 : f32
    %85 = vector.broadcast %cst_30 : f32 to vector<1x128xf32>
    %86 = arith.addf %82, %85 : vector<1x128xf32>
    %87 = math.rsqrt %86 : vector<1x128xf32>
    %88 = vector.broadcast %87 : vector<1x128xf32> to vector<32x128xf32>
    %89 = arith.mulf %84, %88 : vector<32x128xf32>
    %90 = vector.broadcast %6 : vector<1x128xf32> to vector<32x128xf32>
    %91 = arith.mulf %89, %90 : vector<32x128xf32>
    %92 = vector.broadcast %7 : vector<1x128xf32> to vector<32x128xf32>
    %93 = arith.addf %91, %92 : vector<32x128xf32>
    %94 = arith.negf %93 : vector<32x128xf32>
    %95 = math.exp %94 : vector<32x128xf32>
    %cst_31 = arith.constant 1.000000e+00 : f32
    %96 = vector.broadcast %cst_31 : f32 to vector<32x128xf32>
    %97 = arith.addf %96, %95 : vector<32x128xf32>
    %98 = arith.divf %96, %97 : vector<32x128xf32>
    %99 = arith.mulf %93, %98 : vector<32x128xf32>
    %100 = arith.addf %0, %99 : vector<32x128xf32>
    %c0_32 = arith.constant 0 : index
    %c0_33 = arith.constant 0 : index
    %101 = vector.load %arg8[%c0_32, %c0_33] : memref<32x128xf32, #tpu.memory_space<vmem>>, vector<32x128xf32>
    tpu.vector_store %arg8[%c0_32, %c0_33], %100 {strides = array<i32>} : memref<32x128xf32, #tpu.memory_space<vmem>>, vector<32x128xf32>,
    %cst_34 = arith.constant dense<0.000000e+00> : vector<128xf32>
    %102 = vector.multi_reduction <add>, %52, %cst_34 [0] : vector<96x128xf32> to vector<128xf32>
    %103 = vector.shape_cast %102 : vector<128xf32> to vector<1x128xf32>
    %cst_35 = arith.constant 9.600000e+01 : f32
    %104 = vector.broadcast %cst_35 : f32 to vector<1x128xf32>
    %105 = arith.divf %103, %104 : vector<1x128xf32>
    %106 = vector.broadcast %105 : vector<1x128xf32> to vector<96x128xf32>
    %107 = arith.subf %52, %106 : vector<96x128xf32>
    %108 = arith.mulf %107, %107 : vector<96x128xf32>
    %cst_36 = arith.constant dense<0.000000e+00> : vector<128xf32>
    %109 = vector.multi_reduction <add>, %108, %cst_36 [0] : vector<96x128xf32> to vector<128xf32>
    %110 = vector.shape_cast %109 : vector<128xf32> to vector<1x128xf32>
    %cst_37 = arith.constant 9.600000e+01 : f32
    %111 = vector.broadcast %cst_37 : f32 to vector<1x128xf32>
    %112 = arith.divf %110, %111 : vector<1x128xf32>
    %113 = vector.broadcast %105 : vector<1x128xf32> to vector<96x128xf32>
    %114 = arith.subf %52, %113 : vector<96x128xf32>
    %cst_38 = arith.constant 9.99999974E-6 : f32
    %115 = vector.broadcast %cst_38 : f32 to vector<1x128xf32>
    %116 = arith.addf %112, %115 : vector<1x128xf32>
    %117 = math.rsqrt %116 : vector<1x128xf32>
    %118 = vector.broadcast %117 : vector<1x128xf32> to vector<96x128xf32>
    %119 = arith.mulf %114, %118 : vector<96x128xf32>
    %120 = vector.broadcast %8 : vector<1x128xf32> to vector<96x128xf32>
    %121 = arith.mulf %119, %120 : vector<96x128xf32>
    %122 = vector.broadcast %9 : vector<1x128xf32> to vector<96x128xf32>
    %123 = arith.addf %121, %122 : vector<96x128xf32>
    %124 = arith.negf %123 : vector<96x128xf32>
    %125 = math.exp %124 : vector<96x128xf32>
    %cst_39 = arith.constant 1.000000e+00 : f32
    %126 = vector.broadcast %cst_39 : f32 to vector<96x128xf32>
    %127 = arith.addf %126, %125 : vector<96x128xf32>
    %128 = arith.divf %126, %127 : vector<96x128xf32>
    %129 = arith.mulf %123, %128 : vector<96x128xf32>
    %130 = arith.addf %1, %129 : vector<96x128xf32>
    %c0_40 = arith.constant 0 : index
    %c0_41 = arith.constant 0 : index
    %131 = vector.load %arg9[%c0_40, %c0_41] : memref<96x128xf32, #tpu.memory_space<vmem>>, vector<96x128xf32>
    tpu.vector_store %arg9[%c0_40, %c0_41], %130 {strides = array<i32>} : memref<96x128xf32, #tpu.memory_space<vmem>>, vector<96x128xf32>,
    return
  }
}

</mosaic_0001>

<llo_original>
// kernel: edge_gated_graph_conv.1
$region0: #{edge_gated_graph_conv.1}
  #allocation0 [shape = 'u32[]', space=smem, size = 0x4, offset = 0x4, fixed_abs, tag = 'smem constant byte address 0x4 - core index']
  #allocation1 [shape = 'u32[144,128]{1,0:T(1,128)}', space=vmem, size = 0x12000, scoped, tag = 'internal scratch']
  #allocation2 [shape = 'bf16[96,256]{1,0:T(8,128)(2,1)}', space=vmem, size = 0xc000, scoped, tag = 'scratch operand']
  %s0 = inlined_call_operand.vmem [shape: f32[32,128], index: 0, kind: input, shape index: {}]
  %s1 = inlined_call_operand.vmem [shape: f32[96,128], index: 1, kind: input, shape index: {}]
  %s2 = inlined_call_operand.vmem [shape: s32[96,1], index: 2, kind: input, shape index: {}]
  %s3 = inlined_call_operand.vmem [shape: s32[96,1], index: 3, kind: input, shape index: {}]
  %s4 = inlined_call_operand.vmem [shape: s32[1,96], index: 4, kind: input, shape index: {}]
  %s5 = inlined_call_operand.vmem [shape: bf16[128,512], index: 5, kind: input, shape index: {}]
  %s6 = inlined_call_operand.vmem [shape: bf16[128,128], index: 6, kind: input, shape index: {}]
  %s7 = inlined_call_operand.vmem [shape: f32[8,128], index: 7, kind: input, shape index: {}]
  %s8 = inlined_call_operand.hbm [shape: f32[32,128], index: 8, kind: output, shape index: {0}]
  %s9 = inlined_call_operand.hbm [shape: f32[96,128], index: 9, kind: output, shape index: {1}]
  %10 = xla_tuple %s8, %s9
  %s11 = sld [smem:[#allocation0]]
  $region50: #{edge_gated_graph_conv.1} parent=0
    _
  %s13 = ssub.s32 1, %s11
  %s14 = scalar_select 0, %s13, %s11
  $region1: #{edge_gated_graph_conv.1} parent=0
    #allocation3 [shape = 'u8[16384]{0}', space=vmem, size = 0x4000, scoped, tag = 'output window, operand 0, single buffered']
    #allocation4 [shape = 's32[1]{0}', space=sflag, size = 0x4, scoped, tag = 'scoped memory for edge_gated_graph_conv.1']
    #allocation5 [shape = 'u8[49152]{0}', space=vmem, size = 0xc000, scoped, tag = 'output window, operand 1, single buffered']
    #allocation6 [shape = 's32[1]{0}', space=sflag, size = 0x4, scoped, tag = 'scoped memory for edge_gated_graph_conv.1']
    %15 = vsyncpa [#allocation4], 0
    %16 = vsyncpa [#allocation6], 0
    // Predicated region
    $region2: #{edge_gated_graph_conv.1} parent=1 // pred_check
      _
    $region3: #{edge_gated_graph_conv.1} parent=1 // pred_check_branch
      %18 = sbr.rel (0) target = $region5
    $region4: #{edge_gated_graph_conv.1} parent=1 // pred_region
      _
    $region5: #{edge_gated_graph_conv.1} parent=1 // pred_fallthru
      _
    // Predicated region
    $region6: #{edge_gated_graph_conv.1} parent=1 // pred_check
      _
    $region7: #{edge_gated_graph_conv.1} parent=1 // pred_check_branch
      %20 = sbr.rel (0) target = $region9
    $region8: #{edge_gated_graph_conv.1} parent=1 // pred_region
      _
    $region9: #{edge_gated_graph_conv.1} parent=1 // pred_fallthru
      _
    // Predicated region
    $region10: #{edge_gated_graph_conv.1} parent=1 // pred_check
      _
    $region11: #{edge_gated_graph_conv.1} parent=1 // pred_check_branch
      %22 = sbr.rel (0) target = $region13
    $region12: #{edge_gated_graph_conv.1} parent=1 // pred_region
      _
    $region13: #{edge_gated_graph_conv.1} parent=1 // pred_fallthru
      _
    // Predicated region
    $region14: #{edge_gated_graph_conv.1} parent=1 // pred_check
      _
    $region15: #{edge_gated_graph_conv.1} parent=1 // pred_check_branch
      %24 = sbr.rel (0) target = $region17
    $region16: #{edge_gated_graph_conv.1} parent=1 // pred_region
      _
    $region17: #{edge_gated_graph_conv.1} parent=1 // pred_fallthru
      _
    // Predicated region
    $region18: #{edge_gated_graph_conv.1} parent=1 // pred_check
      _
    $region19: #{edge_gated_graph_conv.1} parent=1 // pred_check_branch
      %26 = sbr.rel (0) target = $region21
    $region20: #{edge_gated_graph_conv.1} parent=1 // pred_region
      _
    $region21: #{edge_gated_graph_conv.1} parent=1 // pred_fallthru
      _
    // Predicated region
    $region22: #{edge_gated_graph_conv.1} parent=1 // pred_check
      _
    $region23: #{edge_gated_graph_conv.1} parent=1 // pred_check_branch
      %28 = sbr.rel (0) target = $region25
    $region24: #{edge_gated_graph_conv.1} parent=1 // pred_region
      _
    $region25: #{edge_gated_graph_conv.1} parent=1 // pred_fallthru
      _
    // Predicated region
    $region26: #{edge_gated_graph_conv.1} parent=1 // pred_check
      _
    $region27: #{edge_gated_graph_conv.1} parent=1 // pred_check_branch
      %30 = sbr.rel (0) target = $region29
    $region28: #{edge_gated_graph_conv.1} parent=1 // pred_region
      _
    $region29: #{edge_gated_graph_conv.1} parent=1 // pred_fallthru
      _
    // Predicated region
    $region30: #{edge_gated_graph_conv.1} parent=1 // pred_check
      _
    $region31: #{edge_gated_graph_conv.1} parent=1 // pred_check_branch
      %32 = sbr.rel (0) target = $region33
    $region32: #{edge_gated_graph_conv.1} parent=1 // pred_region
      _
    $region33: #{edge_gated_graph_conv.1} parent=1 // pred_fallthru
      _
    %v34 = vld [vmem:[%s0] sm:$0xff]
    %v35 = vld [vmem:[%s0 + $0x8] sm:$0xff]
    %v36 = vld [vmem:[%s0 + $0x10] sm:$0xff]
    %v37 = vld [vmem:[%s0 + $0x18] sm:$0xff]
    %v38 = vld [vmem:[%s1] sm:$0xff]
    %v39 = vld [vmem:[%s1 + $0x8] sm:$0xff]
    %v40 = vld [vmem:[%s1 + $0x10] sm:$0xff]
    %v41 = vld [vmem:[%s1 + $0x18] sm:$0xff]
    %v42 = vld [vmem:[%s1 + $0x20] sm:$0xff]
    %v43 = vld [vmem:[%s1 + $0x28] sm:$0xff]
    %v44 = vld [vmem:[%s1 + $0x30] sm:$0xff]
    %v45 = vld [vmem:[%s1 + $0x38] sm:$0xff]
    %v46 = vld [vmem:[%s1 + $0x40] sm:$0xff]
    %v47 = vld [vmem:[%s1 + $0x48] sm:$0xff]
    %v48 = vld [vmem:[%s1 + $0x50] sm:$0xff]
    %v49 = vld [vmem:[%s1 + $0x58] sm:$0xff]
    %v50 = vld [vmem:[%s7] sm:$0xff]
    %v51 = vlaneseq
    %v52 = vand.u32 %v51, 127
    %v53 = vld [vmem:[%s2] sm:$0xff]
    %v54 = vld [vmem:[%s2 + $0x8] sm:$0xff]
    %v55 = vld [vmem:[%s2 + $0x10] sm:$0xff]
    %v56 = vld [vmem:[%s2 + $0x18] sm:$0xff]
    %v57 = vld [vmem:[%s2 + $0x20] sm:$0xff]
    %v58 = vld [vmem:[%s2 + $0x28] sm:$0xff]
    %v59 = vld [vmem:[%s2 + $0x30] sm:$0xff]
    %v60 = vld [vmem:[%s2 + $0x38] sm:$0xff]
    %v61 = vld [vmem:[%s2 + $0x40] sm:$0xff]
    %v62 = vld [vmem:[%s2 + $0x48] sm:$0xff]
    %v63 = vld [vmem:[%s2 + $0x50] sm:$0xff]
    %v64 = vld [vmem:[%s2 + $0x58] sm:$0xff]
    %65 = vset.pattern.permute.xlu0 0
    %66 = vperm.xlu0 %65, %v53
    %v67 = vpop.permute.xlu0 %66
    %68 = vset.pattern.permute.xlu0 0
    %69 = vperm.xlu0 %68, %v54
    %v70 = vpop.permute.xlu0 %69
    %71 = vset.pattern.permute.xlu0 0
    %72 = vperm.xlu0 %71, %v55
    %v73 = vpop.permute.xlu0 %72
    %74 = vset.pattern.permute.xlu0 0
    %75 = vperm.xlu0 %74, %v56
    %v76 = vpop.permute.xlu0 %75
    %77 = vset.pattern.permute.xlu0 0
    %78 = vperm.xlu0 %77, %v57
    %v79 = vpop.permute.xlu0 %78
    %80 = vset.pattern.permute.xlu0 0
    %81 = vperm.xlu0 %80, %v58
    %v82 = vpop.permute.xlu0 %81
    %83 = vset.pattern.permute.xlu0 0
    %84 = vperm.xlu0 %83, %v59
    %v85 = vpop.permute.xlu0 %84
    %86 = vset.pattern.permute.xlu0 0
    %87 = vperm.xlu0 %86, %v60
    %v88 = vpop.permute.xlu0 %87
    %89 = vset.pattern.permute.xlu0 0
    %90 = vperm.xlu0 %89, %v61
    %v91 = vpop.permute.xlu0 %90
    %92 = vset.pattern.permute.xlu0 0
    %93 = vperm.xlu0 %92, %v62
    %v94 = vpop.permute.xlu0 %93
    %95 = vset.pattern.permute.xlu0 0
    %96 = vperm.xlu0 %95, %v63
    %v97 = vpop.permute.xlu0 %96
    %98 = vset.pattern.permute.xlu0 0
    %99 = vperm.xlu0 %98, %v64
    %v100 = vpop.permute.xlu0 %99
    %vm101 = vcmp.eq.s32.totalorder %v67, %v52
    %vm102 = vcmp.eq.s32.totalorder %v70, %v52
    %vm103 = vcmp.eq.s32.totalorder %v73, %v52
    %vm104 = vcmp.eq.s32.totalorder %v76, %v52
    %vm105 = vcmp.eq.s32.totalorder %v79, %v52
    %vm106 = vcmp.eq.s32.totalorder %v82, %v52
    %vm107 = vcmp.eq.s32.totalorder %v85, %v52
    %vm108 = vcmp.eq.s32.totalorder %v88, %v52
    %vm109 = vcmp.eq.s32.totalorder %v91, %v52
    %vm110 = vcmp.eq.s32.totalorder %v94, %v52
    %vm111 = vcmp.eq.s32.totalorder %v97, %v52
    %vm112 = vcmp.eq.s32.totalorder %v100, %v52
    %v113 = vsel %vm101, 1, 0
    %v114 = vsel %vm102, 1, 0
    %v115 = vsel %vm103, 1, 0
    %v116 = vsel %vm104, 1, 0
    %v117 = vsel %vm105, 1, 0
    %v118 = vsel %vm106, 1, 0
    %v119 = vsel %vm107, 1, 0
    %v120 = vsel %vm108, 1, 0
    %v121 = vsel %vm109, 1, 0
    %v122 = vsel %vm110, 1, 0
    %v123 = vsel %vm111, 1, 0
    %v124 = vsel %vm112, 1, 0
    %v125 = vcvt.s32.f32 %v113
    %v126 = vcvt.s32.f32 %v114
    %v127 = vcvt.s32.f32 %v115
    %v128 = vcvt.s32.f32 %v116
    %v129 = vcvt.s32.f32 %v117
    %v130 = vcvt.s32.f32 %v118
    %v131 = vcvt.s32.f32 %v119
    %v132 = vcvt.s32.f32 %v120
    %v133 = vcvt.s32.f32 %v121
    %v134 = vcvt.s32.f32 %v122
    %v135 = vcvt.s32.f32 %v123
    %v136 = vcvt.s32.f32 %v124
    %v137 = vpack.c.bf16 %v126, %v125
    %v138 = vpack.c.bf16 %v128, %v127
    %v139 = vpack.c.bf16 %v130, %v129
    %v140 = vpack.c.bf16 %v132, %v131
    %v141 = vpack.c.bf16 %v134, %v133
    %v142 = vpack.c.bf16 %v136, %v135
    %v143 = vld [vmem:[%s3] sm:$0xff]
    %v144 = vld [vmem:[%s3 + $0x8] sm:$0xff]
    %v145 = vld [vmem:[%s3 + $0x10] sm:$0xff]
    %v146 = vld [vmem:[%s3 + $0x18] sm:$0xff]
    %v147 = vld [vmem:[%s3 + $0x20] sm:$0xff]
    %v148 = vld [vmem:[%s3 + $0x28] sm:$0xff]
    %v149 = vld [vmem:[%s3 + $0x30] sm:$0xff]
    %v150 = vld [vmem:[%s3 + $0x38] sm:$0xff]
    %v151 = vld [vmem:[%s3 + $0x40] sm:$0xff]
    %v152 = vld [vmem:[%s3 + $0x48] sm:$0xff]
    %v153 = vld [vmem:[%s3 + $0x50] sm:$0xff]
    %v154 = vld [vmem:[%s3 + $0x58] sm:$0xff]
    %155 = vset.pattern.permute.xlu0 0
    %156 = vperm.xlu0 %155, %v143
    %v157 = vpop.permute.xlu0 %156
    %158 = vset.pattern.permute.xlu0 0
    %159 = vperm.xlu0 %158, %v144
    %v160 = vpop.permute.xlu0 %159
    %161 = vset.pattern.permute.xlu0 0
    %162 = vperm.xlu0 %161, %v145
    %v163 = vpop.permute.xlu0 %162
    %164 = vset.pattern.permute.xlu0 0
    %165 = vperm.xlu0 %164, %v146
    %v166 = vpop.permute.xlu0 %165
    %167 = vset.pattern.permute.xlu0 0
    %168 = vperm.xlu0 %167, %v147
    %v169 = vpop.permute.xlu0 %168
    %170 = vset.pattern.permute.xlu0 0
    %171 = vperm.xlu0 %170, %v148
    %v172 = vpop.permute.xlu0 %171
    %173 = vset.pattern.permute.xlu0 0
    %174 = vperm.xlu0 %173, %v149
    %v175 = vpop.permute.xlu0 %174
    %176 = vset.pattern.permute.xlu0 0
    %177 = vperm.xlu0 %176, %v150
    %v178 = vpop.permute.xlu0 %177
    %179 = vset.pattern.permute.xlu0 0
    %180 = vperm.xlu0 %179, %v151
    %v181 = vpop.permute.xlu0 %180
    %182 = vset.pattern.permute.xlu0 0
    %183 = vperm.xlu0 %182, %v152
    %v184 = vpop.permute.xlu0 %183
    %185 = vset.pattern.permute.xlu0 0
    %186 = vperm.xlu0 %185, %v153
    %v187 = vpop.permute.xlu0 %186
    %188 = vset.pattern.permute.xlu0 0
    %189 = vperm.xlu0 %188, %v154
    %v190 = vpop.permute.xlu0 %189
    %vm191 = vcmp.eq.s32.totalorder %v157, %v52
    %vm192 = vcmp.eq.s32.totalorder %v160, %v52
    %vm193 = vcmp.eq.s32.totalorder %v163, %v52
    %vm194 = vcmp.eq.s32.totalorder %v166, %v52
    %vm195 = vcmp.eq.s32.totalorder %v169, %v52
    %vm196 = vcmp.eq.s32.totalorder %v172, %v52
    %vm197 = vcmp.eq.s32.totalorder %v175, %v52
    %vm198 = vcmp.eq.s32.totalorder %v178, %v52
    %vm199 = vcmp.eq.s32.totalorder %v181, %v52
    %vm200 = vcmp.eq.s32.totalorder %v184, %v52
    %vm201 = vcmp.eq.s32.totalorder %v187, %v52
    %vm202 = vcmp.eq.s32.totalorder %v190, %v52
    %v203 = vsel %vm191, 1, 0
    %v204 = vsel %vm192, 1, 0
    %v205 = vsel %vm193, 1, 0
    %v206 = vsel %vm194, 1, 0
    %v207 = vsel %vm195, 1, 0
    %v208 = vsel %vm196, 1, 0
    %v209 = vsel %vm197, 1, 0
    %v210 = vsel %vm198, 1, 0
    %v211 = vsel %vm199, 1, 0
    %v212 = vsel %vm200, 1, 0
    %v213 = vsel %vm201, 1, 0
    %v214 = vsel %vm202, 1, 0
    %v215 = vcvt.s32.f32 %v203
    %v216 = vcvt.s32.f32 %v204
    %v217 = vcvt.s32.f32 %v205
    %v218 = vcvt.s32.f32 %v206
    %v219 = vcvt.s32.f32 %v207
    %v220 = vcvt.s32.f32 %v208
    %v221 = vcvt.s32.f32 %v209
    %v222 = vcvt.s32.f32 %v210
    %v223 = vcvt.s32.f32 %v211
    %v224 = vcvt.s32.f32 %v212
    %v225 = vcvt.s32.f32 %v213
    %v226 = vcvt.s32.f32 %v214
    %v227 = vpack.c.bf16 %v216, %v215
    %v228 = vpack.c.bf16 %v218, %v217
    %v229 = vpack.c.bf16 %v220, %v219
    %v230 = vpack.c.bf16 %v222, %v221
    %v231 = vpack.c.bf16 %v224, %v223
    %v232 = vpack.c.bf16 %v226, %v225
    %v233 = vlaneseq
    %v234 = vshrl.u32 %v233, 7
    %v235 = vadd.s32 %v234, 8
    %v236 = vadd.s32 %v234, 16
    %v237 = vadd.s32 %v234, 24
    %v238 = vld [vmem:[%s4] sm:$0x1]
    %v239 = vlaneseq
    %v240 = vshrl.u32 %v239, 7
    %v241 = vsub.s32 0, %v240
    %v242 = vrot.slane %v238, %v241
    %vm243 = vcmp.eq.s32.totalorder %v242, %v234
    %vm244 = vcmp.eq.s32.totalorder %v242, %v235
    %vm245 = vcmp.eq.s32.totalorder %v242, %v236
    %vm246 = vcmp.eq.s32.totalorder %v242, %v237
    %v247 = vsel %vm243, 1, 0
    %v248 = vsel %vm244, 1, 0
    %v249 = vsel %vm245, 1, 0
    %v250 = vsel %vm246, 1, 0
    %v251 = vcvt.s32.f32 %v247
    %v252 = vcvt.s32.f32 %v248
    %v253 = vcvt.s32.f32 %v249
    %v254 = vcvt.s32.f32 %v250
    %v255 = vpack.c.bf16 %v252, %v251
    %v256 = vpack.c.bf16 %v254, %v253
    %v257 = vpack.c.bf16 %v35, %v34
    %v258 = vpack.c.bf16 %v37, %v36
    %v259 = vld [vmem:[%s5] sm:$0xff]
    %v260 = vld [vmem:[%s5 + $0x8] sm:$0xff]
    %v261 = vld [vmem:[%s5 + $0x10] sm:$0xff]
    %v262 = vld [vmem:[%s5 + $0x18] sm:$0xff]
    %v263 = vld [vmem:[%s5 + $0x20] sm:$0xff]
    %v264 = vld [vmem:[%s5 + $0x28] sm:$0xff]
    %v265 = vld [vmem:[%s5 + $0x30] sm:$0xff]
    %v266 = vld [vmem:[%s5 + $0x38] sm:$0xff]
    %v267 = vld [vmem:[%s5 + $0x40] sm:$0xff]
    %v268 = vld [vmem:[%s5 + $0x48] sm:$0xff]
    %v269 = vld [vmem:[%s5 + $0x50] sm:$0xff]
    %v270 = vld [vmem:[%s5 + $0x58] sm:$0xff]
    %v271 = vld [vmem:[%s5 + $0x60] sm:$0xff]
    %v272 = vld [vmem:[%s5 + $0x68] sm:$0xff]
    %v273 = vld [vmem:[%s5 + $0x70] sm:$0xff]
    %v274 = vld [vmem:[%s5 + $0x78] sm:$0xff]
    %v275 = vld [vmem:[%s5 + $0x80] sm:$0xff]
    %v276 = vld [vmem:[%s5 + $0x88] sm:$0xff]
    %v277 = vld [vmem:[%s5 + $0x90] sm:$0xff]
    %v278 = vld [vmem:[%s5 + $0x98] sm:$0xff]
    %v279 = vld [vmem:[%s5 + $0xa0] sm:$0xff]
    %v280 = vld [vmem:[%s5 + $0xa8] sm:$0xff]
    %v281 = vld [vmem:[%s5 + $0xb0] sm:$0xff]
    %v282 = vld [vmem:[%s5 + $0xb8] sm:$0xff]
    %v283 = vld [vmem:[%s5 + $0xc0] sm:$0xff]
    %v284 = vld [vmem:[%s5 + $0xc8] sm:$0xff]
    %v285 = vld [vmem:[%s5 + $0xd0] sm:$0xff]
    %v286 = vld [vmem:[%s5 + $0xd8] sm:$0xff]
    %v287 = vld [vmem:[%s5 + $0xe0] sm:$0xff]
    %v288 = vld [vmem:[%s5 + $0xe8] sm:$0xff]
    %v289 = vld [vmem:[%s5 + $0xf0] sm:$0xff]
    %v290 = vld [vmem:[%s5 + $0xf8] sm:$0xff]
    %v323 = vunpack.c.l.b16 %v259
    %v324 = vunpack.c.h.b16 %v259
    %v325 = vunpack.c.l.b16 %v260
    %v326 = vunpack.c.h.b16 %v260
    %v327 = vunpack.c.l.b16 %v261
    %v328 = vunpack.c.h.b16 %v261
    %v329 = vunpack.c.l.b16 %v262
    %v330 = vunpack.c.h.b16 %v262
    %v331 = vunpack.c.l.b16 %v263
    %v332 = vunpack.c.h.b16 %v263
    %v333 = vunpack.c.l.b16 %v264
    %v334 = vunpack.c.h.b16 %v264
    %v335 = vunpack.c.l.b16 %v265
    %v336 = vunpack.c.h.b16 %v265
    %v337 = vunpack.c.l.b16 %v266
    %v338 = vunpack.c.h.b16 %v266
    %v339 = vunpack.c.l.b16 %v267
    %v340 = vunpack.c.h.b16 %v267
    %v341 = vunpack.c.l.b16 %v268
    %v342 = vunpack.c.h.b16 %v268
    %v343 = vunpack.c.l.b16 %v269
    %v344 = vunpack.c.h.b16 %v269
    %v345 = vunpack.c.l.b16 %v270
    %v346 = vunpack.c.h.b16 %v270
    %v347 = vunpack.c.l.b16 %v271
    %v348 = vunpack.c.h.b16 %v271
    %v349 = vunpack.c.l.b16 %v272
    %v350 = vunpack.c.h.b16 %v272
    %v351 = vunpack.c.l.b16 %v273
    %v352 = vunpack.c.h.b16 %v273
    %v353 = vunpack.c.l.b16 %v274
    %v354 = vunpack.c.h.b16 %v274
    %v355 = vunpack.c.l.b16 %v275
    %v356 = vunpack.c.h.b16 %v275
    %v357 = vunpack.c.l.b16 %v276
    %v358 = vunpack.c.h.b16 %v276
    %v359 = vunpack.c.l.b16 %v277
    %v360 = vunpack.c.h.b16 %v277
    %v361 = vunpack.c.l.b16 %v278
    %v362 = vunpack.c.h.b16 %v278
    %v363 = vunpack.c.l.b16 %v279
    %v364 = vunpack.c.h.b16 %v279
    %v365 = vunpack.c.l.b16 %v280
    %v366 = vunpack.c.h.b16 %v280
    %v367 = vunpack.c.l.b16 %v281
    %v368 = vunpack.c.h.b16 %v281
    %v369 = vunpack.c.l.b16 %v282
    %v370 = vunpack.c.h.b16 %v282
    %v371 = vunpack.c.l.b16 %v283
    %v372 = vunpack.c.h.b16 %v283
    %v373 = vunpack.c.l.b16 %v284
    %v374 = vunpack.c.h.b16 %v284
    %v375 = vunpack.c.l.b16 %v285
    %v376 = vunpack.c.h.b16 %v285
    %v377 = vunpack.c.l.b16 %v286
    %v378 = vunpack.c.h.b16 %v286
    %v379 = vunpack.c.l.b16 %v287
    %v380 = vunpack.c.h.b16 %v287
    %v381 = vunpack.c.l.b16 %v288
    %v382 = vunpack.c.h.b16 %v288
    %v383 = vunpack.c.l.b16 %v289
    %v384 = vunpack.c.h.b16 %v289
    %v385 = vunpack.c.l.b16 %v290
    %v386 = vunpack.c.h.b16 %v290
    %v387 = vpack.c.b16 %v327, %v323
    %v388 = vpack.c.b16 %v328, %v324
    %v389 = vpack.c.b16 %v329, %v325
    %v390 = vpack.c.b16 %v330, %v326
    %v391 = vpack.c.b16 %v335, %v331
    %v392 = vpack.c.b16 %v336, %v332
    %v393 = vpack.c.b16 %v337, %v333
    %v394 = vpack.c.b16 %v338, %v334
    %v395 = vpack.c.b16 %v343, %v339
    %v396 = vpack.c.b16 %v344, %v340
    %v397 = vpack.c.b16 %v345, %v341
    %v398 = vpack.c.b16 %v346, %v342
    %v399 = vpack.c.b16 %v351, %v347
    %v400 = vpack.c.b16 %v352, %v348
    %v401 = vpack.c.b16 %v353, %v349
    %v402 = vpack.c.b16 %v354, %v350
    %v403 = vpack.c.b16 %v359, %v355
    %v404 = vpack.c.b16 %v360, %v356
    %v405 = vpack.c.b16 %v361, %v357
    %v406 = vpack.c.b16 %v362, %v358
    %v407 = vpack.c.b16 %v367, %v363
    %v408 = vpack.c.b16 %v368, %v364
    %v409 = vpack.c.b16 %v369, %v365
    %v410 = vpack.c.b16 %v370, %v366
    %v411 = vpack.c.b16 %v375, %v371
    %v412 = vpack.c.b16 %v376, %v372
    %v413 = vpack.c.b16 %v377, %v373
    %v414 = vpack.c.b16 %v378, %v374
    %v415 = vpack.c.b16 %v383, %v379
    %v416 = vpack.c.b16 %v384, %v380
    %v417 = vpack.c.b16 %v385, %v381
    %v418 = vpack.c.b16 %v386, %v382
    %451 = vmatprep.subr.bf16.mxu0 %v416
    %452 = vmatpush1.bf16.msra.mxu0 %v415
    %453 = vmatprep.subr.bf16.mxu0 %v412
    %454 = vmatpush1.bf16.msra.mxu0 %v411
    %455 = vmatprep.subr.bf16.mxu0 %v408
    %456 = vmatpush1.bf16.msra.mxu0 %v407
    %457 = vmatprep.subr.bf16.mxu0 %v404
    %458 = vmatpush1.bf16.msra.mxu0 %v403
    %459 = vmatprep.subr.bf16.mxu0 %v400
    %460 = vmatpush1.bf16.msra.mxu0 %v399
    %461 = vmatprep.subr.bf16.mxu0 %v396
    %462 = vmatpush1.bf16.msra.mxu0 %v395
    %463 = vmatprep.subr.bf16.mxu0 %v392
    %464 = vmatpush1.bf16.msra.mxu0 %v391
    %465 = vmatprep.subr.bf16.mxu0 %v388
    %466 = vmatpush1.bf16.msra.mxu0 %v387
    %467 = vmatprep.subr.bf16.mxu0 0
    %468 = vmatpush2.bf16.msra.mxu0 0
    %469 = vmatprep.subr.bf16.mxu0 0
    %470 = vmatpush2.bf16.msra.mxu0 0
    %471 = vmatprep.subr.bf16.mxu0 0
    %472 = vmatpush2.bf16.msra.mxu0 0
    %473 = vmatprep.subr.bf16.mxu0 0
    %474 = vmatpush2.bf16.msra.mxu0 0
    %475 = vmatprep.subr.bf16.mxu0 0
    %476 = vmatpush2.bf16.msra.mxu0 0
    %477 = vmatprep.subr.bf16.mxu0 0
    %478 = vmatpush2.bf16.msra.mxu0 0
    %479 = vmatprep.subr.bf16.mxu0 0
    %480 = vmatpush2.bf16.msra.mxu0 0
    %481 = vmatprep.subr.bf16.mxu0 0
    %482 = vmatpush2.bf16.msra.mxu0 0
    %483 = vmatprep.mubr.bf16.mxu0 0
    %484 = vmatmul.mubr.bf16.gmra.mxu0 %v257
    %v485 = vpop.f32.mrf.mxu0
    %v486 = vadd.f32 0.0, %v485
    %v487 = vpop.f32.mrf.mxu0
    %v488 = vadd.f32 0.0, %v487
    %v489 = vpop.f32.mrf.mxu0
    %v490 = vadd.f32 0.0, %v489
    %v491 = vpop.f32.mrf.mxu0
    %v492 = vadd.f32 0.0, %v491
    %493 = vmatprep.mubr.bf16.mxu0 0
    %494 = vmatmul.mubr.bf16.gmra.mxu0 %v258
    %v495 = vpop.f32.mrf.mxu0
    %v496 = vadd.f32 0.0, %v495
    %v497 = vpop.f32.mrf.mxu0
    %v498 = vadd.f32 0.0, %v497
    %v499 = vpop.f32.mrf.mxu0
    %v500 = vadd.f32 0.0, %v499
    %v501 = vpop.f32.mrf.mxu0
    %v502 = vadd.f32 0.0, %v501
    %503 = vdwg.mxu0
    %504 = vmatprep.subr.bf16.mxu0 %v418
    %505 = vmatpush1.bf16.msra.mxu0 %v417
    %506 = vmatprep.subr.bf16.mxu0 %v414
    %507 = vmatpush1.bf16.msra.mxu0 %v413
    %508 = vmatprep.subr.bf16.mxu0 %v410
    %509 = vmatpush1.bf16.msra.mxu0 %v409
    %510 = vmatprep.subr.bf16.mxu0 %v406
    %511 = vmatpush1.bf16.msra.mxu0 %v405
    %512 = vmatprep.subr.bf16.mxu0 %v402
    %513 = vmatpush1.bf16.msra.mxu0 %v401
    %514 = vmatprep.subr.bf16.mxu0 %v398
    %515 = vmatpush1.bf16.msra.mxu0 %v397
    %516 = vmatprep.subr.bf16.mxu0 %v394
    %517 = vmatpush1.bf16.msra.mxu0 %v393
    %518 = vmatprep.subr.bf16.mxu0 %v390
    %519 = vmatpush1.bf16.msra.mxu0 %v389
    %520 = vmatprep.subr.bf16.mxu0 0
    %521 = vmatpush2.bf16.msra.mxu0 0
    %522 = vmatprep.subr.bf16.mxu0 0
    %523 = vmatpush2.bf16.msra.mxu0 0
    %524 = vmatprep.subr.bf16.mxu0 0
    %525 = vmatpush2.bf16.msra.mxu0 0
    %526 = vmatprep.subr.bf16.mxu0 0
    %527 = vmatpush2.bf16.msra.mxu0 0
    %528 = vmatprep.subr.bf16.mxu0 0
    %529 = vmatpush2.bf16.msra.mxu0 0
    %530 = vmatprep.subr.bf16.mxu0 0
    %531 = vmatpush2.bf16.msra.mxu0 0
    %532 = vmatprep.subr.bf16.mxu0 0
    %533 = vmatpush2.bf16.msra.mxu0 0
    %534 = vmatprep.subr.bf16.mxu0 0
    %535 = vmatpush2.bf16.msra.mxu0 0
    %536 = vmatprep.mubr.bf16.mxu0 0
    %537 = vmatmul.mubr.bf16.gmra.mxu0 %v257
    %v538 = vpop.f32.mrf.mxu0
    %v539 = vadd.f32 0.0, %v538
    %v540 = vpop.f32.mrf.mxu0
    %v541 = vadd.f32 0.0, %v540
    %v542 = vpop.f32.mrf.mxu0
    %v543 = vadd.f32 0.0, %v542
    %v544 = vpop.f32.mrf.mxu0
    %v545 = vadd.f32 0.0, %v544
    %546 = vmatprep.mubr.bf16.mxu0 0
    %547 = vmatmul.mubr.bf16.gmra.mxu0 %v258
    %v548 = vpop.f32.mrf.mxu0
    %v549 = vadd.f32 0.0, %v548
    %v550 = vpop.f32.mrf.mxu0
    %v551 = vadd.f32 0.0, %v550
    %v552 = vpop.f32.mrf.mxu0
    %v553 = vadd.f32 0.0, %v552
    %v554 = vpop.f32.mrf.mxu0
    %v555 = vadd.f32 0.0, %v554
    %556 = vdwg.mxu0
    %v557 = vlaneseq
    %v558 = vshrl.u32 %v557, 7
    %v559 = vsub.s32 1, %v558
    %v560 = vrot.slane %v50, %v559
    %v561 = vadd.f32 %v541, %v560
    %v562 = vadd.f32 %v545, %v560
    %v563 = vadd.f32 %v551, %v560
    %v564 = vadd.f32 %v555, %v560
    %v565 = vpack.c.bf16 %v490, %v486
    %v566 = vpack.c.bf16 %v492, %v488
    %v567 = vpack.c.bf16 %v500, %v496
    %v568 = vpack.c.bf16 %v502, %v498
    %vm569 = vcmask 261120
    %v571 = vsel %vm569, %v137, 0
    %v574 = vsel %vm569, %v138, 0
    %v577 = vsel %vm569, %v139, 0
    %v580 = vsel %vm569, %v140, 0
    %v583 = vsel %vm569, %v141, 0
    %v586 = vsel %vm569, %v142, 0
    %588 = vmatprep.subr.bf16.mxu0 0
    %589 = vmatpush1.bf16.msra.mxu0 0
    %590 = vmatprep.subr.bf16.mxu0 0
    %591 = vmatpush1.bf16.msra.mxu0 0
    %592 = vmatprep.subr.bf16.mxu0 0
    %593 = vmatpush1.bf16.msra.mxu0 0
    %594 = vmatprep.subr.bf16.mxu0 0
    %595 = vmatpush1.bf16.msra.mxu0 0
    %596 = vmatprep.subr.bf16.mxu0 0
    %597 = vmatpush1.bf16.msra.mxu0 0
    %598 = vmatprep.subr.bf16.mxu0 0
    %599 = vmatpush1.bf16.msra.mxu0 0
    %600 = vmatprep.subr.bf16.mxu0 %v568
    %601 = vmatpush1.bf16.msra.mxu0 %v567
    %602 = vmatprep.subr.bf16.mxu0 %v566
    %603 = vmatpush1.bf16.msra.mxu0 %v565
    %604 = vmatprep.subr.bf16.mxu0 0
    %605 = vmatpush2.bf16.msra.mxu0 0
    %606 = vmatprep.subr.bf16.mxu0 0
    %607 = vmatpush2.bf16.msra.mxu0 0
    %608 = vmatprep.subr.bf16.mxu0 0
    %609 = vmatpush2.bf16.msra.mxu0 0
    %610 = vmatprep.subr.bf16.mxu0 0
    %611 = vmatpush2.bf16.msra.mxu0 0
    %612 = vmatprep.subr.bf16.mxu0 0
    %613 = vmatpush2.bf16.msra.mxu0 0
    %614 = vmatprep.subr.bf16.mxu0 0
    %615 = vmatpush2.bf16.msra.mxu0 0
    %616 = vmatprep.subr.bf16.mxu0 0
    %617 = vmatpush2.bf16.msra.mxu0 0
    %618 = vmatprep.subr.bf16.mxu0 0
    %619 = vmatpush2.bf16.msra.mxu0 0
    %620 = vmatprep.mubr.bf16.mxu0 0
    %621 = vmatmul.mubr.bf16.gmra.mxu0 %v571
    %v622 = vpop.f32.mrf.mxu0
    %v623 = vadd.f32 0.0, %v622
    %v624 = vpop.f32.mrf.mxu0
    %v625 = vadd.f32 0.0, %v624
    %v626 = vpop.f32.mrf.mxu0
    %v627 = vadd.f32 0.0, %v626
    %v628 = vpop.f32.mrf.mxu0
    %v629 = vadd.f32 0.0, %v628
    %630 = vmatprep.mubr.bf16.mxu0 0
    %631 = vmatmul.mubr.bf16.gmra.mxu0 %v574
    %v632 = vpop.f32.mrf.mxu0
    %v633 = vadd.f32 0.0, %v632
    %v634 = vpop.f32.mrf.mxu0
    %v635 = vadd.f32 0.0, %v634
    %v636 = vpop.f32.mrf.mxu0
    %v637 = vadd.f32 0.0, %v636
    %v638 = vpop.f32.mrf.mxu0
    %v639 = vadd.f32 0.0, %v638
    %640 = vmatprep.mubr.bf16.mxu0 0
    %641 = vmatmul.mubr.bf16.gmra.mxu0 %v577
    %v642 = vpop.f32.mrf.mxu0
    %v643 = vadd.f32 0.0, %v642
    %v644 = vpop.f32.mrf.mxu0
    %v645 = vadd.f32 0.0, %v644
    %v646 = vpop.f32.mrf.mxu0
    %v647 = vadd.f32 0.0, %v646
    %v648 = vpop.f32.mrf.mxu0
    %v649 = vadd.f32 0.0, %v648
    %650 = vmatprep.mubr.bf16.mxu0 0
    %651 = vmatmul.mubr.bf16.gmra.mxu0 %v580
    %v652 = vpop.f32.mrf.mxu0
    %v653 = vadd.f32 0.0, %v652
    %v654 = vpop.f32.mrf.mxu0
    %v655 = vadd.f32 0.0, %v654
    %v656 = vpop.f32.mrf.mxu0
    %v657 = vadd.f32 0.0, %v656
    %v658 = vpop.f32.mrf.mxu0
    %v659 = vadd.f32 0.0, %v658
    %660 = vmatprep.mubr.bf16.mxu0 0
    %661 = vmatmul.mubr.bf16.gmra.mxu0 %v583
    %v662 = vpop.f32.mrf.mxu0
    %v663 = vadd.f32 0.0, %v662
    %v664 = vpop.f32.mrf.mxu0
    %v665 = vadd.f32 0.0, %v664
    %v666 = vpop.f32.mrf.mxu0
    %v667 = vadd.f32 0.0, %v666
    %v668 = vpop.f32.mrf.mxu0
    %v669 = vadd.f32 0.0, %v668
    %670 = vmatprep.mubr.bf16.mxu0 0
    %671 = vmatmul.mubr.bf16.gmra.mxu0 %v586
    %v672 = vpop.f32.mrf.mxu0
    %v673 = vadd.f32 0.0, %v672
    %v674 = vpop.f32.mrf.mxu0
    %v675 = vadd.f32 0.0, %v674
    %v676 = vpop.f32.mrf.mxu0
    %v677 = vadd.f32 0.0, %v676
    %v678 = vpop.f32.mrf.mxu0
    %v679 = vadd.f32 0.0, %v678
    %680 = vdwg.mxu0
    %v681 = vlaneseq
    %v682 = vshrl.u32 %v681, 7
    %v683 = vsub.s32 0, %v682
    %v684 = vrot.slane %v50, %v683
    %v685 = vadd.f32 %v625, %v684
    %v686 = vadd.f32 %v629, %v684
    %v687 = vadd.f32 %v635, %v684
    %v688 = vadd.f32 %v639, %v684
    %v689 = vadd.f32 %v645, %v684
    %v690 = vadd.f32 %v649, %v684
    %v691 = vadd.f32 %v655, %v684
    %v692 = vadd.f32 %v659, %v684
    %v693 = vadd.f32 %v665, %v684
    %v694 = vadd.f32 %v669, %v684
    %v695 = vadd.f32 %v675, %v684
    %v696 = vadd.f32 %v679, %v684
    %v697 = vpack.c.bf16 %v543, %v539
    %v698 = vpack.c.bf16 %v553, %v549
    %v700 = vsel %vm569, %v227, 0
    %v703 = vsel %vm569, %v228, 0
    %v706 = vsel %vm569, %v229, 0
    %v709 = vsel %vm569, %v230, 0
    %v712 = vsel %vm569, %v231, 0
    %v715 = vsel %vm569, %v232, 0
    %717 = vmatprep.subr.bf16.mxu0 0
    %718 = vmatpush1.bf16.msra.mxu0 0
    %719 = vmatprep.subr.bf16.mxu0 0
    %720 = vmatpush1.bf16.msra.mxu0 0
    %721 = vmatprep.subr.bf16.mxu0 0
    %722 = vmatpush1.bf16.msra.mxu0 0
    %723 = vmatprep.subr.bf16.mxu0 0
    %724 = vmatpush1.bf16.msra.mxu0 0
    %725 = vmatprep.subr.bf16.mxu0 0
    %726 = vmatpush1.bf16.msra.mxu0 0
    %727 = vmatprep.subr.bf16.mxu0 0
    %728 = vmatpush1.bf16.msra.mxu0 0
    %729 = vmatprep.subr.bf16.mxu0 0
    %730 = vmatpush1.bf16.msra.mxu0 %v698
    %731 = vmatprep.subr.bf16.mxu0 0
    %732 = vmatpush1.bf16.msra.mxu0 %v697
    %733 = vmatprep.subr.bf16.mxu0 0
    %734 = vmatpush2.bf16.msra.mxu0 0
    %735 = vmatprep.subr.bf16.mxu0 0
    %736 = vmatpush2.bf16.msra.mxu0 0
    %737 = vmatprep.subr.bf16.mxu0 0
    %738 = vmatpush2.bf16.msra.mxu0 0
    %739 = vmatprep.subr.bf16.mxu0 0
    %740 = vmatpush2.bf16.msra.mxu0 0
    %741 = vmatprep.subr.bf16.mxu0 0
    %742 = vmatpush2.bf16.msra.mxu0 0
    %743 = vmatprep.subr.bf16.mxu0 0
    %744 = vmatpush2.bf16.msra.mxu0 0
    %745 = vmatprep.subr.bf16.mxu0 0
    %746 = vmatpush2.bf16.msra.mxu0 0
    %747 = vmatprep.subr.bf16.mxu0 0
    %748 = vmatpush2.bf16.msra.mxu0 0
    %749 = vmatprep.mubr.bf16.mxu0 0
    %750 = vmatmul.mubr.bf16.gmra.mxu0 %v700
    %v751 = vpop.f32.mrf.mxu0
    %v752 = vadd.f32 0.0, %v751
    %v753 = vpop.f32.mrf.mxu0
    %v754 = vpop.f32.mrf.mxu0
    %v755 = vadd.f32 0.0, %v754
    %v756 = vpop.f32.mrf.mxu0
    %757 = vmatprep.mubr.bf16.mxu0 0
    %758 = vmatmul.mubr.bf16.gmra.mxu0 %v703
    %v759 = vpop.f32.mrf.mxu0
    %v760 = vadd.f32 0.0, %v759
    %v761 = vpop.f32.mrf.mxu0
    %v762 = vpop.f32.mrf.mxu0
    %v763 = vadd.f32 0.0, %v762
    %v764 = vpop.f32.mrf.mxu0
    %765 = vmatprep.mubr.bf16.mxu0 0
    %766 = vmatmul.mubr.bf16.gmra.mxu0 %v706
    %v767 = vpop.f32.mrf.mxu0
    %v768 = vadd.f32 0.0, %v767
    %v769 = vpop.f32.mrf.mxu0
    %v770 = vpop.f32.mrf.mxu0
    %v771 = vadd.f32 0.0, %v770
    %v772 = vpop.f32.mrf.mxu0
    %773 = vmatprep.mubr.bf16.mxu0 0
    %774 = vmatmul.mubr.bf16.gmra.mxu0 %v709
    %v775 = vpop.f32.mrf.mxu0
    %v776 = vadd.f32 0.0, %v775
    %v777 = vpop.f32.mrf.mxu0
    %v778 = vpop.f32.mrf.mxu0
    %v779 = vadd.f32 0.0, %v778
    %v780 = vpop.f32.mrf.mxu0
    %781 = vmatprep.mubr.bf16.mxu0 0
    %782 = vmatmul.mubr.bf16.gmra.mxu0 %v712
    %v783 = vpop.f32.mrf.mxu0
    %v784 = vadd.f32 0.0, %v783
    %v785 = vpop.f32.mrf.mxu0
    %v786 = vpop.f32.mrf.mxu0
    %v787 = vadd.f32 0.0, %v786
    %v788 = vpop.f32.mrf.mxu0
    %789 = vmatprep.mubr.bf16.mxu0 0
    %790 = vmatmul.mubr.bf16.gmra.mxu0 %v715
    %v791 = vpop.f32.mrf.mxu0
    %v792 = vadd.f32 0.0, %v791
    %v793 = vpop.f32.mrf.mxu0
    %v794 = vpop.f32.mrf.mxu0
    %v795 = vadd.f32 0.0, %v794
    %v796 = vpop.f32.mrf.mxu0
    %797 = vdwg.mxu0
    %v798 = vadd.f32 %v623, %v752
    %v799 = vadd.f32 %v627, %v755
    %v800 = vadd.f32 %v633, %v760
    %v801 = vadd.f32 %v637, %v763
    %v802 = vadd.f32 %v643, %v768
    %v803 = vadd.f32 %v647, %v771
    %v804 = vadd.f32 %v653, %v776
    %v805 = vadd.f32 %v657, %v779
    %v806 = vadd.f32 %v663, %v784
    %v807 = vadd.f32 %v667, %v787
    %v808 = vadd.f32 %v673, %v792
    %v809 = vadd.f32 %v677, %v795
    %v810 = vpack.c.bf16 %v39, %v38
    %v811 = vpack.c.bf16 %v41, %v40
    %v812 = vpack.c.bf16 %v43, %v42
    %v813 = vpack.c.bf16 %v45, %v44
    %v814 = vpack.c.bf16 %v47, %v46
    %v815 = vpack.c.bf16 %v49, %v48
    %v816 = vld [vmem:[%s6] sm:$0xf]
    %v817 = vld [vmem:[%s6 + $0x4] sm:$0xf]
    %v818 = vld [vmem:[%s6 + $0x8] sm:$0xf]
    %v819 = vld [vmem:[%s6 + $0xc] sm:$0xf]
    %v820 = vld [vmem:[%s6 + $0x10] sm:$0xf]
    %v821 = vld [vmem:[%s6 + $0x14] sm:$0xf]
    %v822 = vld [vmem:[%s6 + $0x18] sm:$0xf]
    %v823 = vld [vmem:[%s6 + $0x1c] sm:$0xf]
    %v824 = vld [vmem:[%s6 + $0x20] sm:$0xf]
    %v825 = vld [vmem:[%s6 + $0x24] sm:$0xf]
    %v826 = vld [vmem:[%s6 + $0x28] sm:$0xf]
    %v827 = vld [vmem:[%s6 + $0x2c] sm:$0xf]
    %v828 = vld [vmem:[%s6 + $0x30] sm:$0xf]
    %v829 = vld [vmem:[%s6 + $0x34] sm:$0xf]
    %v830 = vld [vmem:[%s6 + $0x38] sm:$0xf]
    %v831 = vld [vmem:[%s6 + $0x3c] sm:$0xf]
    %v848 = vunpack.c.l.b16 %v816
    %v849 = vunpack.c.l.b16 %v817
    %v850 = vunpack.c.l.b16 %v818
    %v851 = vunpack.c.l.b16 %v819
    %v852 = vunpack.c.l.b16 %v820
    %v853 = vunpack.c.l.b16 %v821
    %v854 = vunpack.c.l.b16 %v822
    %v855 = vunpack.c.l.b16 %v823
    %v856 = vunpack.c.l.b16 %v824
    %v857 = vunpack.c.l.b16 %v825
    %v858 = vunpack.c.l.b16 %v826
    %v859 = vunpack.c.l.b16 %v827
    %v860 = vunpack.c.l.b16 %v828
    %v861 = vunpack.c.l.b16 %v829
    %v862 = vunpack.c.l.b16 %v830
    %v863 = vunpack.c.l.b16 %v831
    %v864 = vpack.c.b16 %v849, %v848
    %v865 = vpack.c.b16 %v851, %v850
    %v866 = vpack.c.b16 %v853, %v852
    %v867 = vpack.c.b16 %v855, %v854
    %v868 = vpack.c.b16 %v857, %v856
    %v869 = vpack.c.b16 %v859, %v858
    %v870 = vpack.c.b16 %v861, %v860
    %v871 = vpack.c.b16 %v863, %v862
    %880 = vmatprep.subr.bf16.mxu0 0
    %881 = vmatpush1.bf16.msra.mxu0 %v871
    %882 = vmatprep.subr.bf16.mxu0 0
    %883 = vmatpush1.bf16.msra.mxu0 %v870
    %884 = vmatprep.subr.bf16.mxu0 0
    %885 = vmatpush1.bf16.msra.mxu0 %v869
    %886 = vmatprep.subr.bf16.mxu0 0
    %887 = vmatpush1.bf16.msra.mxu0 %v868
    %888 = vmatprep.subr.bf16.mxu0 0
    %889 = vmatpush1.bf16.msra.mxu0 %v867
    %890 = vmatprep.subr.bf16.mxu0 0
    %891 = vmatpush1.bf16.msra.mxu0 %v866
    %892 = vmatprep.subr.bf16.mxu0 0
    %893 = vmatpush1.bf16.msra.mxu0 %v865
    %894 = vmatprep.subr.bf16.mxu0 0
    %895 = vmatpush1.bf16.msra.mxu0 %v864
    %896 = vmatprep.subr.bf16.mxu0 0
    %897 = vmatpush2.bf16.msra.mxu0 0
    %898 = vmatprep.subr.bf16.mxu0 0
    %899 = vmatpush2.bf16.msra.mxu0 0
    %900 = vmatprep.subr.bf16.mxu0 0
    %901 = vmatpush2.bf16.msra.mxu0 0
    %902 = vmatprep.subr.bf16.mxu0 0
    %903 = vmatpush2.bf16.msra.mxu0 0
    %904 = vmatprep.subr.bf16.mxu0 0
    %905 = vmatpush2.bf16.msra.mxu0 0
    %906 = vmatprep.subr.bf16.mxu0 0
    %907 = vmatpush2.bf16.msra.mxu0 0
    %908 = vmatprep.subr.bf16.mxu0 0
    %909 = vmatpush2.bf16.msra.mxu0 0
    %910 = vmatprep.subr.bf16.mxu0 0
    %911 = vmatpush2.bf16.msra.mxu0 0
    %912 = vmatprep.mubr.bf16.mxu0 0
    %913 = vmatmul.mubr.bf16.gmra.mxu0 %v810
    %v914 = vpop.f32.mrf.mxu0
    %v915 = vadd.f32 0.0, %v914
    %v916 = vpop.f32.mrf.mxu0
    %v917 = vpop.f32.mrf.mxu0
    %v918 = vadd.f32 0.0, %v917
    %v919 = vpop.f32.mrf.mxu0
    %920 = vmatprep.mubr.bf16.mxu0 0
    %921 = vmatmul.mubr.bf16.gmra.mxu0 %v811
    %v922 = vpop.f32.mrf.mxu0
    %v923 = vadd.f32 0.0, %v922
    %v924 = vpop.f32.mrf.mxu0
    %v925 = vpop.f32.mrf.mxu0
    %v926 = vadd.f32 0.0, %v925
    %v927 = vpop.f32.mrf.mxu0
    %928 = vmatprep.mubr.bf16.mxu0 0
    %929 = vmatmul.mubr.bf16.gmra.mxu0 %v812
    %v930 = vpop.f32.mrf.mxu0
    %v931 = vadd.f32 0.0, %v930
    %v932 = vpop.f32.mrf.mxu0
    %v933 = vpop.f32.mrf.mxu0
    %v934 = vadd.f32 0.0, %v933
    %v935 = vpop.f32.mrf.mxu0
    %936 = vmatprep.mubr.bf16.mxu0 0
    %937 = vmatmul.mubr.bf16.gmra.mxu0 %v813
    %v938 = vpop.f32.mrf.mxu0
    %v939 = vadd.f32 0.0, %v938
    %v940 = vpop.f32.mrf.mxu0
    %v941 = vpop.f32.mrf.mxu0
    %v942 = vadd.f32 0.0, %v941
    %v943 = vpop.f32.mrf.mxu0
    %944 = vmatprep.mubr.bf16.mxu0 0
    %945 = vmatmul.mubr.bf16.gmra.mxu0 %v814
    %v946 = vpop.f32.mrf.mxu0
    %v947 = vadd.f32 0.0, %v946
    %v948 = vpop.f32.mrf.mxu0
    %v949 = vpop.f32.mrf.mxu0
    %v950 = vadd.f32 0.0, %v949
    %v951 = vpop.f32.mrf.mxu0
    %952 = vmatprep.mubr.bf16.mxu0 0
    %953 = vmatmul.mubr.bf16.gmra.mxu0 %v815
    %v954 = vpop.f32.mrf.mxu0
    %v955 = vadd.f32 0.0, %v954
    %v956 = vpop.f32.mrf.mxu0
    %v957 = vpop.f32.mrf.mxu0
    %v958 = vadd.f32 0.0, %v957
    %v959 = vpop.f32.mrf.mxu0
    %960 = vdwg.mxu0
    %v961 = vadd.f32 %v798, %v915
    %v962 = vadd.f32 %v799, %v918
    %v963 = vadd.f32 %v800, %v923
    %v964 = vadd.f32 %v801, %v926
    %v965 = vadd.f32 %v802, %v931
    %v966 = vadd.f32 %v803, %v934
    %v967 = vadd.f32 %v804, %v939
    %v968 = vadd.f32 %v805, %v942
    %v969 = vadd.f32 %v806, %v947
    %v970 = vadd.f32 %v807, %v950
    %v971 = vadd.f32 %v808, %v955
    %v972 = vadd.f32 %v809, %v958
    %v973 = vlaneseq
    %v974 = vshrl.u32 %v973, 7
    %v975 = vsub.s32 2, %v974
    %v976 = vrot.slane %v50, %v975
    %v977 = vadd.f32 %v961, %v976
    %v978 = vadd.f32 %v962, %v976
    %v979 = vadd.f32 %v963, %v976
    %v980 = vadd.f32 %v964, %v976
    %v981 = vadd.f32 %v965, %v976
    %v982 = vadd.f32 %v966, %v976
    %v983 = vadd.f32 %v967, %v976
    %v984 = vadd.f32 %v968, %v976
    %v985 = vadd.f32 %v969, %v976
    %v986 = vadd.f32 %v970, %v976
    %v987 = vadd.f32 %v971, %v976
    %v988 = vadd.f32 %v972, %v976
    %v989 = vxor.u32 %v977, 2147483648
    %v990 = vxor.u32 %v978, 2147483648
    %v991 = vxor.u32 %v979, 2147483648
    %v992 = vxor.u32 %v980, 2147483648
    %v993 = vxor.u32 %v981, 2147483648
    %v994 = vxor.u32 %v982, 2147483648
    %v995 = vxor.u32 %v983, 2147483648
    %v996 = vxor.u32 %v984, 2147483648
    %v997 = vxor.u32 %v985, 2147483648
    %v998 = vxor.u32 %v986, 2147483648
    %v999 = vxor.u32 %v987, 2147483648
    %v1000 = vxor.u32 %v988, 2147483648
    %v1001 = vmul.f32 %v989, 1.442695
    %v1002 = vpow.pop %v1001
    %v1003 = vmul.f32 %v990, 1.442695
    %v1004 = vpow.pop %v1003
    %v1005 = vmul.f32 %v991, 1.442695
    %v1006 = vpow.pop %v1005
    %v1007 = vmul.f32 %v992, 1.442695
    %v1008 = vpow.pop %v1007
    %v1009 = vmul.f32 %v993, 1.442695
    %v1010 = vpow.pop %v1009
    %v1011 = vmul.f32 %v994, 1.442695
    %v1012 = vpow.pop %v1011
    %v1013 = vmul.f32 %v995, 1.442695
    %v1014 = vpow.pop %v1013
    %v1015 = vmul.f32 %v996, 1.442695
    %v1016 = vpow.pop %v1015
    %v1017 = vmul.f32 %v997, 1.442695
    %v1018 = vpow.pop %v1017
    %v1019 = vmul.f32 %v998, 1.442695
    %v1020 = vpow.pop %v1019
    %v1021 = vmul.f32 %v999, 1.442695
    %v1022 = vpow.pop %v1021
    %v1023 = vmul.f32 %v1000, 1.442695
    %v1024 = vpow.pop %v1023
    %v1025 = vadd.f32 %v1002, 1.0
    %v1026 = vadd.f32 %v1004, 1.0
    %v1027 = vadd.f32 %v1006, 1.0
    %v1028 = vadd.f32 %v1008, 1.0
    %v1029 = vadd.f32 %v1010, 1.0
    %v1030 = vadd.f32 %v1012, 1.0
    %v1031 = vadd.f32 %v1014, 1.0
    %v1032 = vadd.f32 %v1016, 1.0
    %v1033 = vadd.f32 %v1018, 1.0
    %v1034 = vadd.f32 %v1020, 1.0
    %v1035 = vadd.f32 %v1022, 1.0
    %v1036 = vadd.f32 %v1024, 1.0
    %v1037 = vrcp.pop %v1025
    %v1038 = vmul.f32 1.0, %v1037
    %v1039 = vrcp.pop %v1026
    %v1040 = vmul.f32 1.0, %v1039
    %v1041 = vrcp.pop %v1027
    %v1042 = vmul.f32 1.0, %v1041
    %v1043 = vrcp.pop %v1028
    %v1044 = vmul.f32 1.0, %v1043
    %v1045 = vrcp.pop %v1029
    %v1046 = vmul.f32 1.0, %v1045
    %v1047 = vrcp.pop %v1030
    %v1048 = vmul.f32 1.0, %v1047
    %v1049 = vrcp.pop %v1031
    %v1050 = vmul.f32 1.0, %v1049
    %v1051 = vrcp.pop %v1032
    %v1052 = vmul.f32 1.0, %v1051
    %v1053 = vrcp.pop %v1033
    %v1054 = vmul.f32 1.0, %v1053
    %v1055 = vrcp.pop %v1034
    %v1056 = vmul.f32 1.0, %v1055
    %v1057 = vrcp.pop %v1035
    %v1058 = vmul.f32 1.0, %v1057
    %v1059 = vrcp.pop %v1036
    %v1060 = vmul.f32 1.0, %v1059
    %v1061 = vmul.f32 %v1038, %v685
    %v1062 = vmul.f32 %v1040, %v686
    %v1063 = vmul.f32 %v1042, %v687
    %v1064 = vmul.f32 %v1044, %v688
    %v1065 = vmul.f32 %v1046, %v689
    %v1066 = vmul.f32 %v1048, %v690
    %v1067 = vmul.f32 %v1050, %v691
    %v1068 = vmul.f32 %v1052, %v692
    %v1069 = vmul.f32 %v1054, %v693
    %v1070 = vmul.f32 %v1056, %v694
    %v1071 = vmul.f32 %v1058, %v695
    %v1072 = vmul.f32 %v1060, %v696
    %v1073 = vpack.c.bf16 %v1062, %v1061
    %v1074 = vpack.c.bf16 %v1064, %v1063
    %v1075 = vpack.c.bf16 %v1066, %v1065
    %v1076 = vpack.c.bf16 %v1068, %v1067
    %v1077 = vpack.c.bf16 %v1070, %v1069
    %v1078 = vpack.c.bf16 %v1072, %v1071
    %v1085 = vunpack.c.l.b16 %v1073
    %v1086 = vunpack.c.h.b16 %v1073
    %v1087 = vunpack.c.l.b16 %v1074
    %v1088 = vunpack.c.h.b16 %v1074
    %v1089 = vunpack.c.l.b16 %v1075
    %v1090 = vunpack.c.h.b16 %v1075
    %v1091 = vunpack.c.l.b16 %v1076
    %v1092 = vunpack.c.h.b16 %v1076
    %v1093 = vunpack.c.l.b16 %v1077
    %v1094 = vunpack.c.h.b16 %v1077
    %v1095 = vunpack.c.l.b16 %v1078
    %v1096 = vunpack.c.h.b16 %v1078
    %v1097 = vpack.c.b16 %v1085, %v1085
    %v1098 = vpack.c.b16 %v1086, %v1086
    %v1099 = vpack.c.b16 %v1087, %v1087
    %v1100 = vpack.c.b16 %v1088, %v1088
    %v1101 = vpack.c.b16 %v1089, %v1089
    %v1102 = vpack.c.b16 %v1090, %v1090
    %v1103 = vpack.c.b16 %v1091, %v1091
    %v1104 = vpack.c.b16 %v1092, %v1092
    %v1105 = vpack.c.b16 %v1093, %v1093
    %v1106 = vpack.c.b16 %v1094, %v1094
    %v1107 = vpack.c.b16 %v1095, %v1095
    %v1108 = vpack.c.b16 %v1096, %v1096
    %1121 = vst [vmem:[#allocation2] sm:$0xf] %v1097
    %1122 = vst [vmem:[#allocation2 + $0x8] sm:$0xf] %v1098
    %1123 = vst [vmem:[#allocation2 + $0x10] sm:$0xf] %v1099
    %1124 = vst [vmem:[#allocation2 + $0x18] sm:$0xf] %v1100
    %1125 = vst [vmem:[#allocation2 + $0x20] sm:$0xf] %v1101
    %1126 = vst [vmem:[#allocation2 + $0x28] sm:$0xf] %v1102
    %1127 = vst [vmem:[#allocation2 + $0x30] sm:$0xf] %v1103
    %1128 = vst [vmem:[#allocation2 + $0x38] sm:$0xf] %v1104
    %1129 = vst [vmem:[#allocation2 + $0x40] sm:$0xf] %v1105
    %1130 = vst [vmem:[#allocation2 + $0x48] sm:$0xf] %v1106
    %1131 = vst [vmem:[#allocation2 + $0x50] sm:$0xf] %v1107
    %1132 = vst [vmem:[#allocation2 + $0x58] sm:$0xf] %v1108
    %v1133 = vpack.c.bf16 %v1040, %v1038
    %v1134 = vpack.c.bf16 %v1044, %v1042
    %v1135 = vpack.c.bf16 %v1048, %v1046
    %v1136 = vpack.c.bf16 %v1052, %v1050
    %v1137 = vpack.c.bf16 %v1056, %v1054
    %v1138 = vpack.c.bf16 %v1060, %v1058
    %v1145 = vunpack.c.l.b16 %v1133
    %v1146 = vunpack.c.h.b16 %v1133
    %v1147 = vunpack.c.l.b16 %v1134
    %v1148 = vunpack.c.h.b16 %v1134
    %v1149 = vunpack.c.l.b16 %v1135
    %v1150 = vunpack.c.h.b16 %v1135
    %v1151 = vunpack.c.l.b16 %v1136
    %v1152 = vunpack.c.h.b16 %v1136
    %v1153 = vunpack.c.l.b16 %v1137
    %v1154 = vunpack.c.h.b16 %v1137
    %v1155 = vunpack.c.l.b16 %v1138
    %v1156 = vunpack.c.h.b16 %v1138
    %v1157 = vpack.c.b16 %v1145, %v1145
    %v1158 = vpack.c.b16 %v1146, %v1146
    %v1159 = vpack.c.b16 %v1147, %v1147
    %v1160 = vpack.c.b16 %v1148, %v1148
    %v1161 = vpack.c.b16 %v1149, %v1149
    %v1162 = vpack.c.b16 %v1150, %v1150
    %v1163 = vpack.c.b16 %v1151, %v1151
    %v1164 = vpack.c.b16 %v1152, %v1152
    %v1165 = vpack.c.b16 %v1153, %v1153
    %v1166 = vpack.c.b16 %v1154, %v1154
    %v1167 = vpack.c.b16 %v1155, %v1155
    %v1168 = vpack.c.b16 %v1156, %v1156
    %1181 = vst [vmem:[#allocation2 + $0x4] sm:$0xf] %v1157
    %1182 = vst [vmem:[#allocation2 + $0xc] sm:$0xf] %v1158
    %1183 = vst [vmem:[#allocation2 + $0x14] sm:$0xf] %v1159
    %1184 = vst [vmem:[#allocation2 + $0x1c] sm:$0xf] %v1160
    %1185 = vst [vmem:[#allocation2 + $0x24] sm:$0xf] %v1161
    %1186 = vst [vmem:[#allocation2 + $0x2c] sm:$0xf] %v1162
    %1187 = vst [vmem:[#allocation2 + $0x34] sm:$0xf] %v1163
    %1188 = vst [vmem:[#allocation2 + $0x3c] sm:$0xf] %v1164
    %1189 = vst [vmem:[#allocation2 + $0x44] sm:$0xf] %v1165
    %1190 = vst [vmem:[#allocation2 + $0x4c] sm:$0xf] %v1166
    %1191 = vst [vmem:[#allocation2 + $0x54] sm:$0xf] %v1167
    %1192 = vst [vmem:[#allocation2 + $0x5c] sm:$0xf] %v1168
    %v1193 = vld [vmem:[#allocation2] sm:$0xff]
    %v1194 = vld [vmem:[#allocation2 + $0x8] sm:$0xff]
    %v1195 = vld [vmem:[#allocation2 + $0x10] sm:$0xff]
    %v1196 = vld [vmem:[#allocation2 + $0x18] sm:$0xff]
    %v1197 = vld [vmem:[#allocation2 + $0x20] sm:$0xff]
    %v1198 = vld [vmem:[#allocation2 + $0x28] sm:$0xff]
    %v1199 = vld [vmem:[#allocation2 + $0x30] sm:$0xff]
    %v1200 = vld [vmem:[#allocation2 + $0x38] sm:$0xff]
    %v1201 = vld [vmem:[#allocation2 + $0x40] sm:$0xff]
    %v1202 = vld [vmem:[#allocation2 + $0x48] sm:$0xff]
    %v1203 = vld [vmem:[#allocation2 + $0x50] sm:$0xff]
    %v1204 = vld [vmem:[#allocation2 + $0x58] sm:$0xff]
    %v1217 = vunpack.c.l.b16 %v1193
    %v1218 = vunpack.c.h.b16 %v1193
    %v1219 = vunpack.c.l.b16 %v1194
    %v1220 = vunpack.c.h.b16 %v1194
    %v1221 = vunpack.c.l.b16 %v1195
    %v1222 = vunpack.c.h.b16 %v1195
    %v1223 = vunpack.c.l.b16 %v1196
    %v1224 = vunpack.c.h.b16 %v1196
    %v1225 = vunpack.c.l.b16 %v1197
    %v1226 = vunpack.c.h.b16 %v1197
    %v1227 = vunpack.c.l.b16 %v1198
    %v1228 = vunpack.c.h.b16 %v1198
    %v1229 = vunpack.c.l.b16 %v1199
    %v1230 = vunpack.c.h.b16 %v1199
    %v1231 = vunpack.c.l.b16 %v1200
    %v1232 = vunpack.c.h.b16 %v1200
    %v1233 = vunpack.c.l.b16 %v1201
    %v1234 = vunpack.c.h.b16 %v1201
    %v1235 = vunpack.c.l.b16 %v1202
    %v1236 = vunpack.c.h.b16 %v1202
    %v1237 = vunpack.c.l.b16 %v1203
    %v1238 = vunpack.c.h.b16 %v1203
    %v1239 = vunpack.c.l.b16 %v1204
    %v1240 = vunpack.c.h.b16 %v1204
    %v1241 = vpack.c.b16 %v1219, %v1217
    %v1242 = vpack.c.b16 %v1220, %v1218
    %v1243 = vpack.c.b16 %v1223, %v1221
    %v1244 = vpack.c.b16 %v1224, %v1222
    %v1245 = vpack.c.b16 %v1227, %v1225
    %v1246 = vpack.c.b16 %v1228, %v1226
    %v1247 = vpack.c.b16 %v1231, %v1229
    %v1248 = vpack.c.b16 %v1232, %v1230
    %v1249 = vpack.c.b16 %v1235, %v1233
    %v1250 = vpack.c.b16 %v1236, %v1234
    %v1251 = vpack.c.b16 %v1239, %v1237
    %v1252 = vpack.c.b16 %v1240, %v1238
    %vm1265 = vcmask 785408
    %v1267 = vsel %vm1265, %v255, 0
    %v1270 = vsel %vm1265, %v256, 0
    %1272 = vmatprep.subr.bf16.mxu0 0
    %1273 = vmatpush1.bf16.msra.mxu0 0
    %1274 = vmatprep.subr.bf16.mxu0 0
    %1275 = vmatpush1.bf16.msra.mxu0 0
    %1276 = vmatprep.subr.bf16.mxu0 %v1252
    %1277 = vmatpush1.bf16.msra.mxu0 %v1251
    %1278 = vmatprep.subr.bf16.mxu0 %v1250
    %1279 = vmatpush1.bf16.msra.mxu0 %v1249
    %1280 = vmatprep.subr.bf16.mxu0 %v1248
    %1281 = vmatpush1.bf16.msra.mxu0 %v1247
    %1282 = vmatprep.subr.bf16.mxu0 %v1246
    %1283 = vmatpush1.bf16.msra.mxu0 %v1245
    %1284 = vmatprep.subr.bf16.mxu0 %v1244
    %1285 = vmatpush1.bf16.msra.mxu0 %v1243
    %1286 = vmatprep.subr.bf16.mxu0 %v1242
    %1287 = vmatpush1.bf16.msra.mxu0 %v1241
    %1288 = vmatprep.subr.bf16.mxu0 0
    %1289 = vmatpush2.bf16.msra.mxu0 0
    %1290 = vmatprep.subr.bf16.mxu0 0
    %1291 = vmatpush2.bf16.msra.mxu0 0
    %1292 = vmatprep.subr.bf16.mxu0 0
    %1293 = vmatpush2.bf16.msra.mxu0 0
    %1294 = vmatprep.subr.bf16.mxu0 0
    %1295 = vmatpush2.bf16.msra.mxu0 0
    %1296 = vmatprep.subr.bf16.mxu0 0
    %1297 = vmatpush2.bf16.msra.mxu0 0
    %1298 = vmatprep.subr.bf16.mxu0 0
    %1299 = vmatpush2.bf16.msra.mxu0 0
    %1300 = vmatprep.subr.bf16.mxu0 0
    %1301 = vmatpush2.bf16.msra.mxu0 0
    %1302 = vmatprep.subr.bf16.mxu0 0
    %1303 = vmatpush2.bf16.msra.mxu0 0
    %1304 = vmatprep.mubr.bf16.mxu0 0
    %1305 = vmatmul.mubr.bf16.gmra.mxu0 %v1267
    %v1306 = vpop.f32.mrf.mxu0
    %v1307 = vadd.f32 0.0, %v1306
    %v1308 = vpop.f32.mrf.mxu0
    %v1309 = vadd.f32 0.0, %v1308
    %v1310 = vpop.f32.mrf.mxu0
    %v1311 = vadd.f32 0.0, %v1310
    %v1312 = vpop.f32.mrf.mxu0
    %v1313 = vadd.f32 0.0, %v1312
    %1314 = vmatprep.mubr.bf16.mxu0 0
    %1315 = vmatmul.mubr.bf16.gmra.mxu0 %v1270
    %v1316 = vpop.f32.mrf.mxu0
    %v1317 = vadd.f32 0.0, %v1316
    %v1318 = vpop.f32.mrf.mxu0
    %v1319 = vadd.f32 0.0, %v1318
    %v1320 = vpop.f32.mrf.mxu0
    %v1321 = vadd.f32 0.0, %v1320
    %v1322 = vpop.f32.mrf.mxu0
    %v1323 = vadd.f32 0.0, %v1322
    %1324 = vdwg.mxu0
    %v1325 = vadd.f32 %v1309, 1e-06
    %v1326 = vadd.f32 %v1313, 1e-06
    %v1327 = vadd.f32 %v1319, 1e-06
    %v1328 = vadd.f32 %v1323, 1e-06
    %v1329 = vrcp.pop %v1325
    %v1330 = vrcp.pop %v1326
    %v1331 = vrcp.pop %v1327
    %v1332 = vrcp.pop %v1328
    %v1333 = vmul.f32 %v1307, %v1329
    %v1334 = vmul.f32 %v1311, %v1330
    %v1335 = vmul.f32 %v1317, %v1331
    %v1336 = vmul.f32 %v1321, %v1332
    %v1337 = vadd.f32 %v561, %v1333
    %v1338 = vadd.f32 %v562, %v1334
    %v1339 = vadd.f32 %v563, %v1335
    %v1340 = vadd.f32 %v564, %v1336
    %v1341 = vadd.f32 %v1337, %v1338
    %v1342 = vadd.f32 %v1341, %v1339
    %v1343 = vadd.f32 %v1342, %v1340
    %v1344 = vrot.slane %v1343, 4
    %v1345 = vadd.f32 %v1343, %v1344
    %v1346 = vrot.slane %v1345, 2
    %v1347 = vadd.f32 %v1345, %v1346
    %v1348 = vrot.slane %v1347, 1
    %v1349 = vadd.f32 %v1347, %v1348
    %v1350 = vrcp.pop 32.0
    %v1351 = vmul.f32 %v1349, %v1350
    %v1352 = vsub.f32 %v1337, %v1351
    %v1353 = vsub.f32 %v1338, %v1351
    %v1354 = vsub.f32 %v1339, %v1351
    %v1355 = vsub.f32 %v1340, %v1351
    %v1356 = vmul.f32 %v1352, %v1352
    %v1357 = vmul.f32 %v1353, %v1353
    %v1358 = vmul.f32 %v1354, %v1354
    %v1359 = vmul.f32 %v1355, %v1355
    %v1360 = vadd.f32 %v1356, %v1357
    %v1361 = vadd.f32 %v1360, %v1358
    %v1362 = vadd.f32 %v1361, %v1359
    %v1363 = vrot.slane %v1362, 4
    %v1364 = vadd.f32 %v1362, %v1363
    %v1365 = vrot.slane %v1364, 2
    %v1366 = vadd.f32 %v1364, %v1365
    %v1367 = vrot.slane %v1366, 1
    %v1368 = vadd.f32 %v1366, %v1367
    %v1369 = vmul.f32 %v1368, %v1350
    %v1370 = vadd.f32 %v1369, 1e-05
    %v1371 = vrsqrt.pop %v1370
    %v1372 = vmul.f32 %v1352, %v1371
    %v1373 = vmul.f32 %v1353, %v1371
    %v1374 = vmul.f32 %v1354, %v1371
    %v1375 = vmul.f32 %v1355, %v1371
    %v1376 = vlaneseq
    %v1377 = vshrl.u32 %v1376, 7
    %v1378 = vsub.s32 3, %v1377
    %v1379 = vrot.slane %v50, %v1378
    %v1380 = vmul.f32 %v1372, %v1379
    %v1381 = vmul.f32 %v1373, %v1379
    %v1382 = vmul.f32 %v1374, %v1379
    %v1383 = vmul.f32 %v1375, %v1379
    %v1384 = vlaneseq
    %v1385 = vshrl.u32 %v1384, 7
    %v1386 = vsub.s32 4, %v1385
    %v1387 = vrot.slane %v50, %v1386
    %v1388 = vadd.f32 %v1380, %v1387
    %v1389 = vadd.f32 %v1381, %v1387
    %v1390 = vadd.f32 %v1382, %v1387
    %v1391 = vadd.f32 %v1383, %v1387
    %v1392 = vxor.u32 %v1388, 2147483648
    %v1393 = vxor.u32 %v1389, 2147483648
    %v1394 = vxor.u32 %v1390, 2147483648
    %v1395 = vxor.u32 %v1391, 2147483648
    %v1396 = vmul.f32 %v1392, 1.442695
    %v1397 = vpow.pop %v1396
    %v1398 = vmul.f32 %v1393, 1.442695
    %v1399 = vpow.pop %v1398
    %v1400 = vmul.f32 %v1394, 1.442695
    %v1401 = vpow.pop %v1400
    %v1402 = vmul.f32 %v1395, 1.442695
    %v1403 = vpow.pop %v1402
    %v1404 = vadd.f32 %v1397, 1.0
    %v1405 = vadd.f32 %v1399, 1.0
    %v1406 = vadd.f32 %v1401, 1.0
    %v1407 = vadd.f32 %v1403, 1.0
    %v1408 = vrcp.pop %v1404
    %v1409 = vmul.f32 1.0, %v1408
    %v1410 = vrcp.pop %v1405
    %v1411 = vmul.f32 1.0, %v1410
    %v1412 = vrcp.pop %v1406
    %v1413 = vmul.f32 1.0, %v1412
    %v1414 = vrcp.pop %v1407
    %v1415 = vmul.f32 1.0, %v1414
    %v1416 = vmul.f32 %v1388, %v1409
    %v1417 = vmul.f32 %v1389, %v1411
    %v1418 = vmul.f32 %v1390, %v1413
    %v1419 = vmul.f32 %v1391, %v1415
    %v1420 = vadd.f32 %v34, %v1416
    %v1421 = vadd.f32 %v35, %v1417
    %v1422 = vadd.f32 %v36, %v1418
    %v1423 = vadd.f32 %v37, %v1419
    %1424 = vst [vmem:[#allocation3] sm:$0xff] %v1420
    %1425 = vst [vmem:[#allocation3 + $0x8] sm:$0xff] %v1421
    %1426 = vst [vmem:[#allocation3 + $0x10] sm:$0xff] %v1422
    %1427 = vst [vmem:[#allocation3 + $0x18] sm:$0xff] %v1423
    %v1428 = vadd.f32 %v977, %v978
    %v1429 = vadd.f32 %v1428, %v979
    %v1430 = vadd.f32 %v1429, %v980
    %v1431 = vadd.f32 %v1430, %v981
    %v1432 = vadd.f32 %v1431, %v982
    %v1433 = vadd.f32 %v1432, %v983
    %v1434 = vadd.f32 %v1433, %v984
    %v1435 = vadd.f32 %v1434, %v985
    %v1436 = vadd.f32 %v1435, %v986
    %v1437 = vadd.f32 %v1436, %v987
    %v1438 = vadd.f32 %v1437, %v988
    %v1439 = vrot.slane %v1438, 4
    %v1440 = vadd.f32 %v1438, %v1439
    %v1441 = vrot.slane %v1440, 2
    %v1442 = vadd.f32 %v1440, %v1441
    %v1443 = vrot.slane %v1442, 1
    %v1444 = vadd.f32 %v1442, %v1443
    %v1445 = vrcp.pop 96.0
    %v1446 = vmul.f32 %v1444, %v1445
    %v1447 = vsub.f32 %v977, %v1446
    %v1448 = vsub.f32 %v978, %v1446
    %v1449 = vsub.f32 %v979, %v1446
    %v1450 = vsub.f32 %v980, %v1446
    %v1451 = vsub.f32 %v981, %v1446
    %v1452 = vsub.f32 %v982, %v1446
    %v1453 = vsub.f32 %v983, %v1446
    %v1454 = vsub.f32 %v984, %v1446
    %v1455 = vsub.f32 %v985, %v1446
    %v1456 = vsub.f32 %v986, %v1446
    %v1457 = vsub.f32 %v987, %v1446
    %v1458 = vsub.f32 %v988, %v1446
    %v1459 = vmul.f32 %v1447, %v1447
    %v1460 = vmul.f32 %v1448, %v1448
    %v1461 = vmul.f32 %v1449, %v1449
    %v1462 = vmul.f32 %v1450, %v1450
    %v1463 = vmul.f32 %v1451, %v1451
    %v1464 = vmul.f32 %v1452, %v1452
    %v1465 = vmul.f32 %v1453, %v1453
    %v1466 = vmul.f32 %v1454, %v1454
    %v1467 = vmul.f32 %v1455, %v1455
    %v1468 = vmul.f32 %v1456, %v1456
    %v1469 = vmul.f32 %v1457, %v1457
    %v1470 = vmul.f32 %v1458, %v1458
    %v1471 = vadd.f32 %v1459, %v1460
    %v1472 = vadd.f32 %v1471, %v1461
    %v1473 = vadd.f32 %v1472, %v1462
    %v1474 = vadd.f32 %v1473, %v1463
    %v1475 = vadd.f32 %v1474, %v1464
    %v1476 = vadd.f32 %v1475, %v1465
    %v1477 = vadd.f32 %v1476, %v1466
    %v1478 = vadd.f32 %v1477, %v1467
    %v1479 = vadd.f32 %v1478, %v1468
    %v1480 = vadd.f32 %v1479, %v1469
    %v1481 = vadd.f32 %v1480, %v1470
    %v1482 = vrot.slane %v1481, 4
    %v1483 = vadd.f32 %v1481, %v1482
    %v1484 = vrot.slane %v1483, 2
    %v1485 = vadd.f32 %v1483, %v1484
    %v1486 = vrot.slane %v1485, 1
    %v1487 = vadd.f32 %v1485, %v1486
    %v1488 = vmul.f32 %v1487, %v1445
    %v1489 = vadd.f32 %v1488, 1e-05
    %v1490 = vrsqrt.pop %v1489
    %v1491 = vmul.f32 %v1447, %v1490
    %v1492 = vmul.f32 %v1448, %v1490
    %v1493 = vmul.f32 %v1449, %v1490
    %v1494 = vmul.f32 %v1450, %v1490
    %v1495 = vmul.f32 %v1451, %v1490
    %v1496 = vmul.f32 %v1452, %v1490
    %v1497 = vmul.f32 %v1453, %v1490
    %v1498 = vmul.f32 %v1454, %v1490
    %v1499 = vmul.f32 %v1455, %v1490
    %v1500 = vmul.f32 %v1456, %v1490
    %v1501 = vmul.f32 %v1457, %v1490
    %v1502 = vmul.f32 %v1458, %v1490
    %v1503 = vlaneseq
    %v1504 = vshrl.u32 %v1503, 7
    %v1505 = vsub.s32 5, %v1504
    %v1506 = vrot.slane %v50, %v1505
    %v1507 = vmul.f32 %v1491, %v1506
    %v1508 = vmul.f32 %v1492, %v1506
    %v1509 = vmul.f32 %v1493, %v1506
    %v1510 = vmul.f32 %v1494, %v1506
    %v1511 = vmul.f32 %v1495, %v1506
    %v1512 = vmul.f32 %v1496, %v1506
    %v1513 = vmul.f32 %v1497, %v1506
    %v1514 = vmul.f32 %v1498, %v1506
    %v1515 = vmul.f32 %v1499, %v1506
    %v1516 = vmul.f32 %v1500, %v1506
    %v1517 = vmul.f32 %v1501, %v1506
    %v1518 = vmul.f32 %v1502, %v1506
    %v1519 = vlaneseq
    %v1520 = vshrl.u32 %v1519, 7
    %v1521 = vsub.s32 6, %v1520
    %v1522 = vrot.slane %v50, %v1521
    %v1523 = vadd.f32 %v1507, %v1522
    %v1524 = vadd.f32 %v1508, %v1522
    %v1525 = vadd.f32 %v1509, %v1522
    %v1526 = vadd.f32 %v1510, %v1522
    %v1527 = vadd.f32 %v1511, %v1522
    %v1528 = vadd.f32 %v1512, %v1522
    %v1529 = vadd.f32 %v1513, %v1522
    %v1530 = vadd.f32 %v1514, %v1522
    %v1531 = vadd.f32 %v1515, %v1522
    %v1532 = vadd.f32 %v1516, %v1522
    %v1533 = vadd.f32 %v1517, %v1522
    %v1534 = vadd.f32 %v1518, %v1522
    %v1535 = vxor.u32 %v1523, 2147483648
    %v1536 = vxor.u32 %v1524, 2147483648
    %v1537 = vxor.u32 %v1525, 2147483648
    %v1538 = vxor.u32 %v1526, 2147483648
    %v1539 = vxor.u32 %v1527, 2147483648
    %v1540 = vxor.u32 %v1528, 2147483648
    %v1541 = vxor.u32 %v1529, 2147483648
    %v1542 = vxor.u32 %v1530, 2147483648
    %v1543 = vxor.u32 %v1531, 2147483648
    %v1544 = vxor.u32 %v1532, 2147483648
    %v1545 = vxor.u32 %v1533, 2147483648
    %v1546 = vxor.u32 %v1534, 2147483648
    %v1547 = vmul.f32 %v1535, 1.442695
    %v1548 = vpow.pop %v1547
    %v1549 = vmul.f32 %v1536, 1.442695
    %v1550 = vpow.pop %v1549
    %v1551 = vmul.f32 %v1537, 1.442695
    %v1552 = vpow.pop %v1551
    %v1553 = vmul.f32 %v1538, 1.442695
    %v1554 = vpow.pop %v1553
    %v1555 = vmul.f32 %v1539, 1.442695
    %v1556 = vpow.pop %v1555
    %v1557 = vmul.f32 %v1540, 1.442695
    %v1558 = vpow.pop %v1557
    %v1559 = vmul.f32 %v1541, 1.442695
    %v1560 = vpow.pop %v1559
    %v1561 = vmul.f32 %v1542, 1.442695
    %v1562 = vpow.pop %v1561
    %v1563 = vmul.f32 %v1543, 1.442695
    %v1564 = vpow.pop %v1563
    %v1565 = vmul.f32 %v1544, 1.442695
    %v1566 = vpow.pop %v1565
    %v1567 = vmul.f32 %v1545, 1.442695
    %v1568 = vpow.pop %v1567
    %v1569 = vmul.f32 %v1546, 1.442695
    %v1570 = vpow.pop %v1569
    %v1571 = vadd.f32 %v1548, 1.0
    %v1572 = vadd.f32 %v1550, 1.0
    %v1573 = vadd.f32 %v1552, 1.0
    %v1574 = vadd.f32 %v1554, 1.0
    %v1575 = vadd.f32 %v1556, 1.0
    %v1576 = vadd.f32 %v1558, 1.0
    %v1577 = vadd.f32 %v1560, 1.0
    %v1578 = vadd.f32 %v1562, 1.0
    %v1579 = vadd.f32 %v1564, 1.0
    %v1580 = vadd.f32 %v1566, 1.0
    %v1581 = vadd.f32 %v1568, 1.0
    %v1582 = vadd.f32 %v1570, 1.0
    %v1583 = vrcp.pop %v1571
    %v1584 = vmul.f32 1.0, %v1583
    %v1585 = vrcp.pop %v1572
    %v1586 = vmul.f32 1.0, %v1585
    %v1587 = vrcp.pop %v1573
    %v1588 = vmul.f32 1.0, %v1587
    %v1589 = vrcp.pop %v1574
    %v1590 = vmul.f32 1.0, %v1589
    %v1591 = vrcp.pop %v1575
    %v1592 = vmul.f32 1.0, %v1591
    %v1593 = vrcp.pop %v1576
    %v1594 = vmul.f32 1.0, %v1593
    %v1595 = vrcp.pop %v1577
    %v1596 = vmul.f32 1.0, %v1595
    %v1597 = vrcp.pop %v1578
    %v1598 = vmul.f32 1.0, %v1597
    %v1599 = vrcp.pop %v1579
    %v1600 = vmul.f32 1.0, %v1599
    %v1601 = vrcp.pop %v1580
    %v1602 = vmul.f32 1.0, %v1601
    %v1603 = vrcp.pop %v1581
    %v1604 = vmul.f32 1.0, %v1603
    %v1605 = vrcp.pop %v1582
    %v1606 = vmul.f32 1.0, %v1605
    %v1607 = vmul.f32 %v1523, %v1584
    %v1608 = vmul.f32 %v1524, %v1586
    %v1609 = vmul.f32 %v1525, %v1588
    %v1610 = vmul.f32 %v1526, %v1590
    %v1611 = vmul.f32 %v1527, %v1592
    %v1612 = vmul.f32 %v1528, %v1594
    %v1613 = vmul.f32 %v1529, %v1596
    %v1614 = vmul.f32 %v1530, %v1598
    %v1615 = vmul.f32 %v1531, %v1600
    %v1616 = vmul.f32 %v1532, %v1602
    %v1617 = vmul.f32 %v1533, %v1604
    %v1618 = vmul.f32 %v1534, %v1606
    %v1619 = vadd.f32 %v38, %v1607
    %v1620 = vadd.f32 %v39, %v1608
    %v1621 = vadd.f32 %v40, %v1609
    %v1622 = vadd.f32 %v41, %v1610
    %v1623 = vadd.f32 %v42, %v1611
    %v1624 = vadd.f32 %v43, %v1612
    %v1625 = vadd.f32 %v44, %v1613
    %v1626 = vadd.f32 %v45, %v1614
    %v1627 = vadd.f32 %v46, %v1615
    %v1628 = vadd.f32 %v47, %v1616
    %v1629 = vadd.f32 %v48, %v1617
    %v1630 = vadd.f32 %v49, %v1618
    %1631 = vst [vmem:[#allocation5] sm:$0xff] %v1619
    %1632 = vst [vmem:[#allocation5 + $0x8] sm:$0xff] %v1620
    %1633 = vst [vmem:[#allocation5 + $0x10] sm:$0xff] %v1621
    %1634 = vst [vmem:[#allocation5 + $0x18] sm:$0xff] %v1622
    %1635 = vst [vmem:[#allocation5 + $0x20] sm:$0xff] %v1623
    %1636 = vst [vmem:[#allocation5 + $0x28] sm:$0xff] %v1624
    %1637 = vst [vmem:[#allocation5 + $0x30] sm:$0xff] %v1625
    %1638 = vst [vmem:[#allocation5 + $0x38] sm:$0xff] %v1626
    %1639 = vst [vmem:[#allocation5 + $0x40] sm:$0xff] %v1627
    %1640 = vst [vmem:[#allocation5 + $0x48] sm:$0xff] %v1628
    %1641 = vst [vmem:[#allocation5 + $0x50] sm:$0xff] %v1629
    %1642 = vst [vmem:[#allocation5 + $0x58] sm:$0xff] %v1630
    // Predicated region
    $region34: #{edge_gated_graph_conv.1} parent=1 // pred_check
      _
    $region35: #{edge_gated_graph_conv.1} parent=1 // pred_check_branch
      %1644 = sbr.rel (0) target = $region37
    $region36: #{edge_gated_graph_conv.1} parent=1 // pred_region
      %s1646 = ssub.s32 512, 512
      %1647 = vsyncadd [#allocation4], %s1646
      %s1648 = sshll.u32 [#allocation3], 4
      %s1649 = int_to_ptr.vmem [resolvable:$true] %s1648
      %1654 = dma.vmem_to_hbm [thread:$0]  %s1649, 512, %s8, [#allocation4], 128, 128, 8
    $region37: #{edge_gated_graph_conv.1} parent=1 // pred_fallthru
      _
    // Predicated region
    $region38: #{edge_gated_graph_conv.1} parent=1 // pred_check
      _
    $region39: #{edge_gated_graph_conv.1} parent=1 // pred_check_branch
      %1656 = sbr.rel (0) target = $region41
    $region40: #{edge_gated_graph_conv.1} parent=1 // pred_region
      %s1658 = ssub.s32 1536, 1536
      %1659 = vsyncadd [#allocation6], %s1658
      %s1660 = sshll.u32 [#allocation5], 4
      %s1661 = int_to_ptr.vmem [resolvable:$true] %s1660
      %1666 = dma.vmem_to_hbm [thread:$0]  %s1661, 1536, %s9, [#allocation6], 128, 128, 8
    $region41: #{edge_gated_graph_conv.1} parent=1 // pred_fallthru
      _
    // Predicated region
    $region42: #{edge_gated_graph_conv.1} parent=1 // pred_check
      _
    $region43: #{edge_gated_graph_conv.1} parent=1 // pred_check_branch
      %1668 = sbr.rel (0) target = $region45
    $region44: #{edge_gated_graph_conv.1} parent=1 // pred_region
      %1669 = dma.done [#allocation4], 512
    $region45: #{edge_gated_graph_conv.1} parent=1 // pred_fallthru
      _
    // Predicated region
    $region46: #{edge_gated_graph_conv.1} parent=1 // pred_check
      _
    $region47: #{edge_gated_graph_conv.1} parent=1 // pred_check_branch
      %1671 = sbr.rel (0) target = $region49
    $region48: #{edge_gated_graph_conv.1} parent=1 // pred_region
      %1672 = dma.done [#allocation6], 1536
    $region49: #{edge_gated_graph_conv.1} parent=1 // pred_fallthru
      _
    %1673 = vsyncpa [#allocation4], 1
    %1674 = vsyncpa [#allocation6], 1

</llo_original>
